<compile_context>
chip_gen: v6e
topology: v6e:2x2x1
jax: 0.10.0
libtpu: 0.0.40
codegen_flags: <defaults>
</compile_context>

<pallas_src>
import jax
import jax.numpy as jnp
import numpy as np
from jax.experimental import pallas as pl
from jax.experimental.pallas import tpu as pltpu

EPS = 1e-5


def _fused_kernel(x_ref, cond_ref, keepc_ref, keepr_ref,
                  wk_ref, bk_ref, wsb_ref, bsb_ref,
                  wlin_ref, blin_ref, o_ref):
    T = x_ref.shape[1]
    Cp = x_ref.shape[2]                 # (padded) input channels of layer 0
    C = cond_ref.shape[2]               # n_chans
    L = wk_ref.shape[0]
    K = wk_ref.shape[1] // Cp
    half = K // 2

    cond = cond_ref[0].astype(jnp.float32)       # [T, C]   (hoisted, reused by all layers)
    keep_c = keepc_ref[0]                        # [T, 1]   (1 - padding), column form
    keep_r = keepr_ref[0]                        # [1, T]   (1 - padding), lane-dense row

    h = x_ref[0].astype(jnp.float32)             # [T, Cp]

    for l in range(L):                           # static unroll over layers
        h_in = h
        if l > 0 and Cp > C:                     # only if idim > n_chans (static branch)
            h_in = jnp.concatenate(
                [h, jnp.zeros((T, Cp - C), jnp.float32)], axis=1)

        # ---- Conv1d (kernel K, 'same' zero padding) as im2col + ONE matmul ----
        if half > 0:
            zrow = jnp.zeros((half, Cp), jnp.float32)
            hp = jnp.concatenate([zrow, h_in, zrow], axis=0)   # [T + K - 1, Cp]
        else:
            hp = h_in
        xin = jnp.concatenate([hp[k:k + T, :] for k in range(K)], axis=1)  # [T, K*Cp]
        y = jnp.dot(xin, wk_ref[l], preferred_element_type=jnp.float32) + bk_ref[l]
        y = jnp.maximum(y, 0.0)                  # ReLU

        # ---- Conditional LayerNorm: normalize over TIME (per batch, per channel) ----
        mean = jnp.mean(y, axis=0, keepdims=True)                # [1, C]
        var = jnp.mean((y - mean) ** 2, axis=0, keepdims=True)   # [1, C]
        yn = (y - mean) * jax.lax.rsqrt(var + EPS)
        # fused scale/bias projection: one dot against [C, 2C]
        sb = jnp.dot(cond, wsb_ref[l], preferred_element_type=jnp.float32) + bsb_ref[l]
        scale = sb[:, :C]
        bias = sb[:, C:]
        # TODO(synk): Dropout is identity in eval/inference mode; not implemented.
        h = (yn * scale + bias) * keep_c         # mask padded timesteps

    # ---- Head: Linear(C, 1) -> Softplus -> mask, emitted lane-dense as [1, T] ----
    z = jnp.dot(wlin_ref[...], h.T, preferred_element_type=jnp.float32) + blin_ref[...]
    z = jnp.maximum(z, 0.0) + jnp.log1p(jnp.exp(-jnp.abs(z)))    # stable softplus
    o_ref[0] = (z * keep_r).astype(o_ref.dtype)


def cond_duration_predictor(x, cond, x_padding, params):
    """x: [B, T, idim], cond: [B, T, n_chans], x_padding: [B, T] -> out [B, T]."""
    B, T, idim = x.shape
    C = cond.shape[-1]
    layers = params["layers"]
    L = len(layers)
    K = layers[0][0].shape[0]
    Cp = max(idim, C)                            # common Cin so per-layer weights stack

    xp = jnp.pad(x, ((0, 0), (0, 0), (0, Cp - idim))) if Cp > idim else x

    wk_l, bk_l, wsb_l, bsb_l = [], [], [], []
    for (wk, bk, ws, bs, wb, bb) in layers:
        cin = wk.shape[1]
        if cin < Cp:                             # zero-pad input channels (no-op math)
            wk = jnp.pad(wk, ((0, 0), (0, Cp - cin), (0, 0)))
        wk_l.append(wk.reshape(K * Cp, C))       # pre-reshape for im2col dot
        bk_l.append(bk)
        wsb_l.append(jnp.concatenate([ws, wb], axis=1))   # [C, 2C] fused scale|bias
        bsb_l.append(jnp.concatenate([bs, bb], axis=1))   # [1, 2C]
    wk_all = jnp.stack(wk_l)      # [L, K*Cp, C]
    bk_all = jnp.stack(bk_l)      # [L, 1, C]
    wsb_all = jnp.stack(wsb_l)    # [L, C, 2C]
    bsb_all = jnp.stack(bsb_l)    # [L, 1, 2C]

    keep = 1.0 - x_padding.astype(jnp.float32)   # precomputed host-side
    keep_col = keep[:, :, None]                  # [B, T, 1]
    keep_row = keep[:, None, :]                  # [B, 1, T]

    w_lin_row = params["w_lin"].T                # [1, C]
    b_lin = params["b_lin"]                      # [1, 1]

    out = pl.pallas_call(
        _fused_kernel,
        out_shape=jax.ShapeDtypeStruct((B, 1, T), jnp.float32),
        grid=(B,),
        in_specs=[
            pl.BlockSpec((1, T, Cp), lambda b: (b, 0, 0)),       # x (channel-padded)
            pl.BlockSpec((1, T, C), lambda b: (b, 0, 0)),        # cond
            pl.BlockSpec((1, T, 1), lambda b: (b, 0, 0)),        # keep (column)
            pl.BlockSpec((1, 1, T), lambda b: (b, 0, 0)),        # keep (lane row)
            pl.BlockSpec((L, K * Cp, C), lambda b: (0, 0, 0)),   # conv weights (stacked, im2col)
            pl.BlockSpec((L, 1, C), lambda b: (0, 0, 0)),        # conv biases
            pl.BlockSpec((L, C, 2 * C), lambda b: (0, 0, 0)),    # CLN scale|bias weights
            pl.BlockSpec((L, 1, 2 * C), lambda b: (0, 0, 0)),    # CLN scale|bias biases
            pl.BlockSpec((1, C), lambda b: (0, 0)),              # head weight (row)
            pl.BlockSpec((1, 1), lambda b: (0, 0)),              # head bias
        ],
        out_specs=pl.BlockSpec((1, 1, T), lambda b: (b, 0, 0)),  # lane-dense [1, T]
        compiler_params=pltpu.CompilerParams(
            dimension_semantics=("parallel",)),                  # megacore on v7x
    )(xp, cond, keep_col, keep_row, wk_all, bk_all, wsb_all, bsb_all,
      w_lin_row, b_lin)
    return out[:, 0, :]


# ---------------- pure-JAX reference (for correctness check) ----------------
def ref_forward(x, cond, x_padding, params):
    hi = jax.lax.Precision.HIGHEST
    keep = (1.0 - x_padding.astype(jnp.float32))[:, :, None]
    h = x
    for (wk, bk, ws, bs, wb, bb) in params["layers"]:
        B, T, Cin = h.shape
        K = wk.shape[0]
        hp = jnp.pad(h, ((0, 0), (K // 2, K // 2), (0, 0)))
        y = sum(jnp.einsum("bti,io->bto", hp[:, k:k + T, :], wk[k], precision=hi)
                for k in range(K)) + bk
        y = jnp.maximum(y, 0.0)
        mean = y.mean(axis=1, keepdims=True)          # mean over TIME
        var = ((y - mean) ** 2).mean(axis=1, keepdims=True)
        yn = (y - mean) / jnp.sqrt(var + EPS)
        scale = jnp.einsum("btc,cd->btd", cond, ws, precision=hi) + bs
        bias = jnp.einsum("btc,cd->btd", cond, wb, precision=hi) + bb
        h = (yn * scale + bias) * keep
    z = jnp.einsum("btc,cd->btd", h, params["w_lin"], precision=hi) + params["b_lin"]
    z = jax.nn.softplus(z) * keep
    return z[..., 0]


def init_params(key, idim, n_chans, kernel_size, n_layers):
    layers = []
    for idx in range(n_layers):
        cin = idim if idx == 0 else n_chans
        key, *ks = jax.random.split(key, 7)
        wk = jax.random.normal(ks[0], (kernel_size, cin, n_chans), jnp.float32) / np.sqrt(cin * kernel_size)
        bk = 0.01 * jax.random.normal(ks[1], (1, n_chans), jnp.float32)
        # Conditional_LayerNorm: W_scale / W_bias (init near reset_parameters + noise)
        ws = 0.02 * jax.random.normal(ks[2], (n_chans, n_chans), jnp.float32)
        bs = 1.0 + 0.02 * jax.random.normal(ks[3], (1, n_chans), jnp.float32)
        wb = 0.02 * jax.random.normal(ks[4], (n_chans, n_chans), jnp.float32)
        bb = 0.02 * jax.random.normal(ks[5], (1, n_chans), jnp.float32)
        layers.append((wk, bk, ws, bs, wb, bb))
    key, k1, k2 = jax.random.split(key, 3)
    w_lin = jax.random.normal(k1, (n_chans, 1), jnp.float32) / np.sqrt(n_chans)
    b_lin = 0.01 * jax.random.normal(k2, (1, 1), jnp.float32)
    return {"layers": layers, "w_lin": w_lin, "b_lin": b_lin}


if __name__ == "__main__":
    B, T, idim, n_chans, K, n_layers = 2, 16, 8, 32, 3, 5

    key = jax.random.PRNGKey(0)
    kx, kc = jax.random.split(key, 2)
    x = jax.random.normal(kx, (B, T, idim), jnp.float32)
    cond = jax.random.normal(kc, (B, T, n_chans), jnp.float32)
    lengths = jnp.array([T, T - 4], jnp.int32)
    x_padding = (jnp.arange(T)[None, :] >= lengths[:, None]).astype(jnp.float32)

    params = init_params(jax.random.PRNGKey(42), idim, n_chans, K, n_layers)

    out = cond_duration_predictor(x, cond, x_padding, params)
    out = jax.block_until_ready(out)

    ref = ref_forward(x, cond, x_padding, params)
    np.testing.assert_allclose(np.asarray(out), np.asarray(ref), rtol=2e-2, atol=2e-2)
    assert out.shape == (B, T)
    print("KERNEL_OK")
</pallas_src>

<mosaic_0001>
module attributes {stable_mosaic.version = 11 : i64} {
  func.func @_fused_kernel(%arg0: i32, %arg1: memref<1x16x32xf32, #tpu.memory_space<vmem>>, %arg2: memref<1x16x32xf32, #tpu.memory_space<vmem>>, %arg3: memref<1x16x1xf32, #tpu.memory_space<vmem>>, %arg4: memref<1x1x16xf32, #tpu.memory_space<vmem>>, %arg5: memref<5x96x32xf32, #tpu.memory_space<vmem>>, %arg6: memref<5x1x32xf32, #tpu.memory_space<vmem>>, %arg7: memref<5x32x64xf32, #tpu.memory_space<vmem>>, %arg8: memref<5x1x64xf32, #tpu.memory_space<vmem>>, %arg9: memref<1x32xf32, #tpu.memory_space<vmem>>, %arg10: memref<1x1xf32, #tpu.memory_space<vmem>>, %arg11: memref<1x1x16xf32, #tpu.memory_space<vmem>>) attributes {dimension_semantics = [#tpu.dimension_semantics<parallel>], iteration_bounds = array<i64: 2>, scalar_prefetch = 0 : i64, scratch_operands = 0 : i64, tpu.core_type = #tpu.core_type<tc>, window_params = [{transform_indices = @transform_0, window_bounds = array<i64: 1, 16, 32>}, {transform_indices = @transform_1, window_bounds = array<i64: 1, 16, 32>}, {transform_indices = @transform_2, window_bounds = array<i64: 1, 16, 1>}, {transform_indices = @transform_3, window_bounds = array<i64: 1, 1, 16>}, {pipeline_mode = #tpu.pipeline_mode<synchronous>, transform_indices = @transform_4, window_bounds = array<i64: 5, 96, 32>}, {pipeline_mode = #tpu.pipeline_mode<synchronous>, transform_indices = @transform_5, window_bounds = array<i64: 5, 1, 32>}, {pipeline_mode = #tpu.pipeline_mode<synchronous>, transform_indices = @transform_6, window_bounds = array<i64: 5, 32, 64>}, {pipeline_mode = #tpu.pipeline_mode<synchronous>, transform_indices = @transform_7, window_bounds = array<i64: 5, 1, 64>}, {pipeline_mode = #tpu.pipeline_mode<synchronous>, transform_indices = @transform_8, window_bounds = array<i64: 1, 32>}, {pipeline_mode = #tpu.pipeline_mode<synchronous>, transform_indices = @transform_9, window_bounds = array<i64: 1, 1>}, {transform_indices = @transform_10, window_bounds = array<i64: 1, 1, 16>}]} {
    %c0 = arith.constant 0 : index
    %c0_0 = arith.constant 0 : index
    %c0_1 = arith.constant 0 : index
    %0 = vector.load %arg2[%c0, %c0_0, %c0_1] : memref<1x16x32xf32, #tpu.memory_space<vmem>>, vector<1x16x32xf32>
    %1 = vector.shape_cast %0 : vector<1x16x32xf32> to vector<16x32xf32>
    %c0_2 = arith.constant 0 : index
    %c0_3 = arith.constant 0 : index
    %c0_4 = arith.constant 0 : index
    %2 = vector.load %arg3[%c0_2, %c0_3, %c0_4] : memref<1x16x1xf32, #tpu.memory_space<vmem>>, vector<1x16x1xf32>
    %3 = vector.shape_cast %2 : vector<1x16x1xf32> to vector<16x1xf32>
    %c0_5 = arith.constant 0 : index
    %c0_6 = arith.constant 0 : index
    %c0_7 = arith.constant 0 : index
    %4 = vector.load %arg4[%c0_5, %c0_6, %c0_7] : memref<1x1x16xf32, #tpu.memory_space<vmem>>, vector<1x1x16xf32>
    %5 = vector.shape_cast %4 : vector<1x1x16xf32> to vector<1x16xf32>
    %c0_8 = arith.constant 0 : index
    %c0_9 = arith.constant 0 : index
    %c0_10 = arith.constant 0 : index
    %6 = vector.load %arg1[%c0_8, %c0_9, %c0_10] : memref<1x16x32xf32, #tpu.memory_space<vmem>>, vector<1x16x32xf32>
    %7 = vector.shape_cast %6 : vector<1x16x32xf32> to vector<16x32xf32>
    %cst = arith.constant 0.000000e+00 : f32
    %8 = vector.broadcast %cst : f32 to vector<1x32xf32>
    %9 = tpu.concatenate %8, %7, %8 in 0 : vector<1x32xf32>, vector<16x32xf32>, vector<1x32xf32> -> vector<18x32xf32>
    %10 = vector.extract_strided_slice %9 {offsets = [0, 0], sizes = [16, 32], strides = [1, 1]} : vector<18x32xf32> to vector<16x32xf32>
    %11 = vector.extract_strided_slice %9 {offsets = [1, 0], sizes = [16, 32], strides = [1, 1]} : vector<18x32xf32> to vector<16x32xf32>
    %12 = vector.extract_strided_slice %9 {offsets = [2, 0], sizes = [16, 32], strides = [1, 1]} : vector<18x32xf32> to vector<16x32xf32>
    %13 = tpu.concatenate %10, %11, %12 in 1 : vector<16x32xf32>, vector<16x32xf32>, vector<16x32xf32> -> vector<16x96xf32>
    %c0_11 = arith.constant 0 : index
    %c0_12 = arith.constant 0 : index
    %c0_13 = arith.constant 0 : index
    %14 = vector.load %arg5[%c0_11, %c0_12, %c0_13] : memref<5x96x32xf32, #tpu.memory_space<vmem>>, vector<1x96x32xf32>
    %15 = vector.shape_cast %14 : vector<1x96x32xf32> to vector<96x32xf32>
    %cst_14 = arith.constant dense<0.000000e+00> : vector<16x32xf32>
    %16 = tpu.matmul %13, %15, %cst_14 {dimension_numbers = #tpu.dot_dimension_numbers<[1], [0], [0], [1], [0, 0, 1, 1], [], []>} : vector<16x96xf32>, vector<96x32xf32>, vector<16x32xf32> -> vector<16x32xf32>
    %c0_15 = arith.constant 0 : index
    %c0_16 = arith.constant 0 : index
    %c0_17 = arith.constant 0 : index
    %17 = vector.load %arg6[%c0_15, %c0_16, %c0_17] : memref<5x1x32xf32, #tpu.memory_space<vmem>>, vector<1x1x32xf32>
    %18 = vector.shape_cast %17 : vector<1x1x32xf32> to vector<1x32xf32>
    %19 = vector.broadcast %18 : vector<1x32xf32> to vector<16x32xf32>
    %20 = arith.addf %16, %19 : vector<16x32xf32>
    %cst_18 = arith.constant 0.000000e+00 : f32
    %21 = vector.broadcast %cst_18 : f32 to vector<16x32xf32>
    %22 = arith.maximumf %20, %21 : vector<16x32xf32>
    %cst_19 = arith.constant dense<0.000000e+00> : vector<32xf32>
    %23 = vector.multi_reduction <add>, %22, %cst_19 [0] : vector<16x32xf32> to vector<32xf32>
    %24 = vector.shape_cast %23 : vector<32xf32> to vector<1x32xf32>
    %cst_20 = arith.constant 1.600000e+01 : f32
    %25 = vector.broadcast %cst_20 : f32 to vector<1x32xf32>
    %26 = arith.divf %24, %25 : vector<1x32xf32>
    %27 = vector.broadcast %26 : vector<1x32xf32> to vector<16x32xf32>
    %28 = arith.subf %22, %27 : vector<16x32xf32>
    %29 = arith.mulf %28, %28 : vector<16x32xf32>
    %cst_21 = arith.constant dense<0.000000e+00> : vector<32xf32>
    %30 = vector.multi_reduction <add>, %29, %cst_21 [0] : vector<16x32xf32> to vector<32xf32>
    %31 = vector.shape_cast %30 : vector<32xf32> to vector<1x32xf32>
    %cst_22 = arith.constant 1.600000e+01 : f32
    %32 = vector.broadcast %cst_22 : f32 to vector<1x32xf32>
    %33 = arith.divf %31, %32 : vector<1x32xf32>
    %34 = vector.broadcast %26 : vector<1x32xf32> to vector<16x32xf32>
    %35 = arith.subf %22, %34 : vector<16x32xf32>
    %cst_23 = arith.constant 9.99999974E-6 : f32
    %36 = vector.broadcast %cst_23 : f32 to vector<1x32xf32>
    %37 = arith.addf %33, %36 : vector<1x32xf32>
    %38 = math.rsqrt %37 : vector<1x32xf32>
    %39 = vector.broadcast %38 : vector<1x32xf32> to vector<16x32xf32>
    %40 = arith.mulf %35, %39 : vector<16x32xf32>
    %c0_24 = arith.constant 0 : index
    %c0_25 = arith.constant 0 : index
    %c0_26 = arith.constant 0 : index
    %41 = vector.load %arg7[%c0_24, %c0_25, %c0_26] : memref<5x32x64xf32, #tpu.memory_space<vmem>>, vector<1x32x64xf32>
    %42 = vector.shape_cast %41 : vector<1x32x64xf32> to vector<32x64xf32>
    %cst_27 = arith.constant dense<0.000000e+00> : vector<16x64xf32>
    %43 = tpu.matmul %1, %42, %cst_27 {dimension_numbers = #tpu.dot_dimension_numbers<[1], [0], [0], [1], [0, 0, 1, 1], [], []>} : vector<16x32xf32>, vector<32x64xf32>, vector<16x64xf32> -> vector<16x64xf32>
    %c0_28 = arith.constant 0 : index
    %c0_29 = arith.constant 0 : index
    %c0_30 = arith.constant 0 : index
    %44 = vector.load %arg8[%c0_28, %c0_29, %c0_30] : memref<5x1x64xf32, #tpu.memory_space<vmem>>, vector<1x1x64xf32>
    %45 = vector.shape_cast %44 : vector<1x1x64xf32> to vector<1x64xf32>
    %46 = vector.broadcast %45 : vector<1x64xf32> to vector<16x64xf32>
    %47 = arith.addf %43, %46 : vector<16x64xf32>
    %48 = vector.extract_strided_slice %47 {offsets = [0, 0], sizes = [16, 32], strides = [1, 1]} : vector<16x64xf32> to vector<16x32xf32>
    %49 = vector.extract_strided_slice %47 {offsets = [0, 32], sizes = [16, 32], strides = [1, 1]} : vector<16x64xf32> to vector<16x32xf32>
    %50 = arith.mulf %40, %48 : vector<16x32xf32>
    %51 = arith.addf %50, %49 : vector<16x32xf32>
    %52 = vector.broadcast %3 : vector<16x1xf32> to vector<16x32xf32>
    %53 = arith.mulf %51, %52 : vector<16x32xf32>
    %cst_31 = arith.constant 0.000000e+00 : f32
    %54 = vector.broadcast %cst_31 : f32 to vector<1x32xf32>
    %55 = tpu.concatenate %54, %53, %54 in 0 : vector<1x32xf32>, vector<16x32xf32>, vector<1x32xf32> -> vector<18x32xf32>
    %56 = vector.extract_strided_slice %55 {offsets = [0, 0], sizes = [16, 32], strides = [1, 1]} : vector<18x32xf32> to vector<16x32xf32>
    %57 = vector.extract_strided_slice %55 {offsets = [1, 0], sizes = [16, 32], strides = [1, 1]} : vector<18x32xf32> to vector<16x32xf32>
    %58 = vector.extract_strided_slice %55 {offsets = [2, 0], sizes = [16, 32], strides = [1, 1]} : vector<18x32xf32> to vector<16x32xf32>
    %59 = tpu.concatenate %56, %57, %58 in 1 : vector<16x32xf32>, vector<16x32xf32>, vector<16x32xf32> -> vector<16x96xf32>
    %c1 = arith.constant 1 : index
    %c0_32 = arith.constant 0 : index
    %c0_33 = arith.constant 0 : index
    %60 = vector.load %arg5[%c1, %c0_32, %c0_33] : memref<5x96x32xf32, #tpu.memory_space<vmem>>, vector<1x96x32xf32>
    %61 = vector.shape_cast %60 : vector<1x96x32xf32> to vector<96x32xf32>
    %cst_34 = arith.constant dense<0.000000e+00> : vector<16x32xf32>
    %62 = tpu.matmul %59, %61, %cst_34 {dimension_numbers = #tpu.dot_dimension_numbers<[1], [0], [0], [1], [0, 0, 1, 1], [], []>} : vector<16x96xf32>, vector<96x32xf32>, vector<16x32xf32> -> vector<16x32xf32>
    %c1_35 = arith.constant 1 : index
    %c0_36 = arith.constant 0 : index
    %c0_37 = arith.constant 0 : index
    %63 = vector.load %arg6[%c1_35, %c0_36, %c0_37] : memref<5x1x32xf32, #tpu.memory_space<vmem>>, vector<1x1x32xf32>
    %64 = vector.shape_cast %63 : vector<1x1x32xf32> to vector<1x32xf32>
    %65 = vector.broadcast %64 : vector<1x32xf32> to vector<16x32xf32>
    %66 = arith.addf %62, %65 : vector<16x32xf32>
    %cst_38 = arith.constant 0.000000e+00 : f32
    %67 = vector.broadcast %cst_38 : f32 to vector<16x32xf32>
    %68 = arith.maximumf %66, %67 : vector<16x32xf32>
    %cst_39 = arith.constant dense<0.000000e+00> : vector<32xf32>
    %69 = vector.multi_reduction <add>, %68, %cst_39 [0] : vector<16x32xf32> to vector<32xf32>
    %70 = vector.shape_cast %69 : vector<32xf32> to vector<1x32xf32>
    %cst_40 = arith.constant 1.600000e+01 : f32
    %71 = vector.broadcast %cst_40 : f32 to vector<1x32xf32>
    %72 = arith.divf %70, %71 : vector<1x32xf32>
    %73 = vector.broadcast %72 : vector<1x32xf32> to vector<16x32xf32>
    %74 = arith.subf %68, %73 : vector<16x32xf32>
    %75 = arith.mulf %74, %74 : vector<16x32xf32>
    %cst_41 = arith.constant dense<0.000000e+00> : vector<32xf32>
    %76 = vector.multi_reduction <add>, %75, %cst_41 [0] : vector<16x32xf32> to vector<32xf32>
    %77 = vector.shape_cast %76 : vector<32xf32> to vector<1x32xf32>
    %cst_42 = arith.constant 1.600000e+01 : f32
    %78 = vector.broadcast %cst_42 : f32 to vector<1x32xf32>
    %79 = arith.divf %77, %78 : vector<1x32xf32>
    %80 = vector.broadcast %72 : vector<1x32xf32> to vector<16x32xf32>
    %81 = arith.subf %68, %80 : vector<16x32xf32>
    %cst_43 = arith.constant 9.99999974E-6 : f32
    %82 = vector.broadcast %cst_43 : f32 to vector<1x32xf32>
    %83 = arith.addf %79, %82 : vector<1x32xf32>
    %84 = math.rsqrt %83 : vector<1x32xf32>
    %85 = vector.broadcast %84 : vector<1x32xf32> to vector<16x32xf32>
    %86 = arith.mulf %81, %85 : vector<16x32xf32>
    %c1_44 = arith.constant 1 : index
    %c0_45 = arith.constant 0 : index
    %c0_46 = arith.constant 0 : index
    %87 = vector.load %arg7[%c1_44, %c0_45, %c0_46] : memref<5x32x64xf32, #tpu.memory_space<vmem>>, vector<1x32x64xf32>
    %88 = vector.shape_cast %87 : vector<1x32x64xf32> to vector<32x64xf32>
    %cst_47 = arith.constant dense<0.000000e+00> : vector<16x64xf32>
    %89 = tpu.matmul %1, %88, %cst_47 {dimension_numbers = #tpu.dot_dimension_numbers<[1], [0], [0], [1], [0, 0, 1, 1], [], []>} : vector<16x32xf32>, vector<32x64xf32>, vector<16x64xf32> -> vector<16x64xf32>
    %c1_48 = arith.constant 1 : index
    %c0_49 = arith.constant 0 : index
    %c0_50 = arith.constant 0 : index
    %90 = vector.load %arg8[%c1_48, %c0_49, %c0_50] : memref<5x1x64xf32, #tpu.memory_space<vmem>>, vector<1x1x64xf32>
    %91 = vector.shape_cast %90 : vector<1x1x64xf32> to vector<1x64xf32>
    %92 = vector.broadcast %91 : vector<1x64xf32> to vector<16x64xf32>
    %93 = arith.addf %89, %92 : vector<16x64xf32>
    %94 = vector.extract_strided_slice %93 {offsets = [0, 0], sizes = [16, 32], strides = [1, 1]} : vector<16x64xf32> to vector<16x32xf32>
    %95 = vector.extract_strided_slice %93 {offsets = [0, 32], sizes = [16, 32], strides = [1, 1]} : vector<16x64xf32> to vector<16x32xf32>
    %96 = arith.mulf %86, %94 : vector<16x32xf32>
    %97 = arith.addf %96, %95 : vector<16x32xf32>
    %98 = vector.broadcast %3 : vector<16x1xf32> to vector<16x32xf32>
    %99 = arith.mulf %97, %98 : vector<16x32xf32>
    %cst_51 = arith.constant 0.000000e+00 : f32
    %100 = vector.broadcast %cst_51 : f32 to vector<1x32xf32>
    %101 = tpu.concatenate %100, %99, %100 in 0 : vector<1x32xf32>, vector<16x32xf32>, vector<1x32xf32> -> vector<18x32xf32>
    %102 = vector.extract_strided_slice %101 {offsets = [0, 0], sizes = [16, 32], strides = [1, 1]} : vector<18x32xf32> to vector<16x32xf32>
    %103 = vector.extract_strided_slice %101 {offsets = [1, 0], sizes = [16, 32], strides = [1, 1]} : vector<18x32xf32> to vector<16x32xf32>
    %104 = vector.extract_strided_slice %101 {offsets = [2, 0], sizes = [16, 32], strides = [1, 1]} : vector<18x32xf32> to vector<16x32xf32>
    %105 = tpu.concatenate %102, %103, %104 in 1 : vector<16x32xf32>, vector<16x32xf32>, vector<16x32xf32> -> vector<16x96xf32>
    %c2 = arith.constant 2 : index
    %c0_52 = arith.constant 0 : index
    %c0_53 = arith.constant 0 : index
    %106 = vector.load %arg5[%c2, %c0_52, %c0_53] : memref<5x96x32xf32, #tpu.memory_space<vmem>>, vector<1x96x32xf32>
    %107 = vector.shape_cast %106 : vector<1x96x32xf32> to vector<96x32xf32>
    %cst_54 = arith.constant dense<0.000000e+00> : vector<16x32xf32>
    %108 = tpu.matmul %105, %107, %cst_54 {dimension_numbers = #tpu.dot_dimension_numbers<[1], [0], [0], [1], [0, 0, 1, 1], [], []>} : vector<16x96xf32>, vector<96x32xf32>, vector<16x32xf32> -> vector<16x32xf32>
    %c2_55 = arith.constant 2 : index
    %c0_56 = arith.constant 0 : index
    %c0_57 = arith.constant 0 : index
    %109 = vector.load %arg6[%c2_55, %c0_56, %c0_57] : memref<5x1x32xf32, #tpu.memory_space<vmem>>, vector<1x1x32xf32>
    %110 = vector.shape_cast %109 : vector<1x1x32xf32> to vector<1x32xf32>
    %111 = vector.broadcast %110 : vector<1x32xf32> to vector<16x32xf32>
    %112 = arith.addf %108, %111 : vector<16x32xf32>
    %cst_58 = arith.constant 0.000000e+00 : f32
    %113 = vector.broadcast %cst_58 : f32 to vector<16x32xf32>
    %114 = arith.maximumf %112, %113 : vector<16x32xf32>
    %cst_59 = arith.constant dense<0.000000e+00> : vector<32xf32>
    %115 = vector.multi_reduction <add>, %114, %cst_59 [0] : vector<16x32xf32> to vector<32xf32>
    %116 = vector.shape_cast %115 : vector<32xf32> to vector<1x32xf32>
    %cst_60 = arith.constant 1.600000e+01 : f32
    %117 = vector.broadcast %cst_60 : f32 to vector<1x32xf32>
    %118 = arith.divf %116, %117 : vector<1x32xf32>
    %119 = vector.broadcast %118 : vector<1x32xf32> to vector<16x32xf32>
    %120 = arith.subf %114, %119 : vector<16x32xf32>
    %121 = arith.mulf %120, %120 : vector<16x32xf32>
    %cst_61 = arith.constant dense<0.000000e+00> : vector<32xf32>
    %122 = vector.multi_reduction <add>, %121, %cst_61 [0] : vector<16x32xf32> to vector<32xf32>
    %123 = vector.shape_cast %122 : vector<32xf32> to vector<1x32xf32>
    %cst_62 = arith.constant 1.600000e+01 : f32
    %124 = vector.broadcast %cst_62 : f32 to vector<1x32xf32>
    %125 = arith.divf %123, %124 : vector<1x32xf32>
    %126 = vector.broadcast %118 : vector<1x32xf32> to vector<16x32xf32>
    %127 = arith.subf %114, %126 : vector<16x32xf32>
    %cst_63 = arith.constant 9.99999974E-6 : f32
    %128 = vector.broadcast %cst_63 : f32 to vector<1x32xf32>
    %129 = arith.addf %125, %128 : vector<1x32xf32>
    %130 = math.rsqrt %129 : vector<1x32xf32>
    %131 = vector.broadcast %130 : vector<1x32xf32> to vector<16x32xf32>
    %132 = arith.mulf %127, %131 : vector<16x32xf32>
    %c2_64 = arith.constant 2 : index
    %c0_65 = arith.constant 0 : index
    %c0_66 = arith.constant 0 : index
    %133 = vector.load %arg7[%c2_64, %c0_65, %c0_66] : memref<5x32x64xf32, #tpu.memory_space<vmem>>, vector<1x32x64xf32>
    %134 = vector.shape_cast %133 : vector<1x32x64xf32> to vector<32x64xf32>
    %cst_67 = arith.constant dense<0.000000e+00> : vector<16x64xf32>
    %135 = tpu.matmul %1, %134, %cst_67 {dimension_numbers = #tpu.dot_dimension_numbers<[1], [0], [0], [1], [0, 0, 1, 1], [], []>} : vector<16x32xf32>, vector<32x64xf32>, vector<16x64xf32> -> vector<16x64xf32>
    %c2_68 = arith.constant 2 : index
    %c0_69 = arith.constant 0 : index
    %c0_70 = arith.constant 0 : index
    %136 = vector.load %arg8[%c2_68, %c0_69, %c0_70] : memref<5x1x64xf32, #tpu.memory_space<vmem>>, vector<1x1x64xf32>
    %137 = vector.shape_cast %136 : vector<1x1x64xf32> to vector<1x64xf32>
    %138 = vector.broadcast %137 : vector<1x64xf32> to vector<16x64xf32>
    %139 = arith.addf %135, %138 : vector<16x64xf32>
    %140 = vector.extract_strided_slice %139 {offsets = [0, 0], sizes = [16, 32], strides = [1, 1]} : vector<16x64xf32> to vector<16x32xf32>
    %141 = vector.extract_strided_slice %139 {offsets = [0, 32], sizes = [16, 32], strides = [1, 1]} : vector<16x64xf32> to vector<16x32xf32>
    %142 = arith.mulf %132, %140 : vector<16x32xf32>
    %143 = arith.addf %142, %141 : vector<16x32xf32>
    %144 = vector.broadcast %3 : vector<16x1xf32> to vector<16x32xf32>
    %145 = arith.mulf %143, %144 : vector<16x32xf32>
    %cst_71 = arith.constant 0.000000e+00 : f32
    %146 = vector.broadcast %cst_71 : f32 to vector<1x32xf32>
    %147 = tpu.concatenate %146, %145, %146 in 0 : vector<1x32xf32>, vector<16x32xf32>, vector<1x32xf32> -> vector<18x32xf32>
    %148 = vector.extract_strided_slice %147 {offsets = [0, 0], sizes = [16, 32], strides = [1, 1]} : vector<18x32xf32> to vector<16x32xf32>
    %149 = vector.extract_strided_slice %147 {offsets = [1, 0], sizes = [16, 32], strides = [1, 1]} : vector<18x32xf32> to vector<16x32xf32>
    %150 = vector.extract_strided_slice %147 {offsets = [2, 0], sizes = [16, 32], strides = [1, 1]} : vector<18x32xf32> to vector<16x32xf32>
    %151 = tpu.concatenate %148, %149, %150 in 1 : vector<16x32xf32>, vector<16x32xf32>, vector<16x32xf32> -> vector<16x96xf32>
    %c3 = arith.constant 3 : index
    %c0_72 = arith.constant 0 : index
    %c0_73 = arith.constant 0 : index
    %152 = vector.load %arg5[%c3, %c0_72, %c0_73] : memref<5x96x32xf32, #tpu.memory_space<vmem>>, vector<1x96x32xf32>
    %153 = vector.shape_cast %152 : vector<1x96x32xf32> to vector<96x32xf32>
    %cst_74 = arith.constant dense<0.000000e+00> : vector<16x32xf32>
    %154 = tpu.matmul %151, %153, %cst_74 {dimension_numbers = #tpu.dot_dimension_numbers<[1], [0], [0], [1], [0, 0, 1, 1], [], []>} : vector<16x96xf32>, vector<96x32xf32>, vector<16x32xf32> -> vector<16x32xf32>
    %c3_75 = arith.constant 3 : index
    %c0_76 = arith.constant 0 : index
    %c0_77 = arith.constant 0 : index
    %155 = vector.load %arg6[%c3_75, %c0_76, %c0_77] : memref<5x1x32xf32, #tpu.memory_space<vmem>>, vector<1x1x32xf32>
    %156 = vector.shape_cast %155 : vector<1x1x32xf32> to vector<1x32xf32>
    %157 = vector.broadcast %156 : vector<1x32xf32> to vector<16x32xf32>
    %158 = arith.addf %154, %157 : vector<16x32xf32>
    %cst_78 = arith.constant 0.000000e+00 : f32
    %159 = vector.broadcast %cst_78 : f32 to vector<16x32xf32>
    %160 = arith.maximumf %158, %159 : vector<16x32xf32>
    %cst_79 = arith.constant dense<0.000000e+00> : vector<32xf32>
    %161 = vector.multi_reduction <add>, %160, %cst_79 [0] : vector<16x32xf32> to vector<32xf32>
    %162 = vector.shape_cast %161 : vector<32xf32> to vector<1x32xf32>
    %cst_80 = arith.constant 1.600000e+01 : f32
    %163 = vector.broadcast %cst_80 : f32 to vector<1x32xf32>
    %164 = arith.divf %162, %163 : vector<1x32xf32>
    %165 = vector.broadcast %164 : vector<1x32xf32> to vector<16x32xf32>
    %166 = arith.subf %160, %165 : vector<16x32xf32>
    %167 = arith.mulf %166, %166 : vector<16x32xf32>
    %cst_81 = arith.constant dense<0.000000e+00> : vector<32xf32>
    %168 = vector.multi_reduction <add>, %167, %cst_81 [0] : vector<16x32xf32> to vector<32xf32>
    %169 = vector.shape_cast %168 : vector<32xf32> to vector<1x32xf32>
    %cst_82 = arith.constant 1.600000e+01 : f32
    %170 = vector.broadcast %cst_82 : f32 to vector<1x32xf32>
    %171 = arith.divf %169, %170 : vector<1x32xf32>
    %172 = vector.broadcast %164 : vector<1x32xf32> to vector<16x32xf32>
    %173 = arith.subf %160, %172 : vector<16x32xf32>
    %cst_83 = arith.constant 9.99999974E-6 : f32
    %174 = vector.broadcast %cst_83 : f32 to vector<1x32xf32>
    %175 = arith.addf %171, %174 : vector<1x32xf32>
    %176 = math.rsqrt %175 : vector<1x32xf32>
    %177 = vector.broadcast %176 : vector<1x32xf32> to vector<16x32xf32>
    %178 = arith.mulf %173, %177 : vector<16x32xf32>
    %c3_84 = arith.constant 3 : index
    %c0_85 = arith.constant 0 : index
    %c0_86 = arith.constant 0 : index
    %179 = vector.load %arg7[%c3_84, %c0_85, %c0_86] : memref<5x32x64xf32, #tpu.memory_space<vmem>>, vector<1x32x64xf32>
    %180 = vector.shape_cast %179 : vector<1x32x64xf32> to vector<32x64xf32>
    %cst_87 = arith.constant dense<0.000000e+00> : vector<16x64xf32>
    %181 = tpu.matmul %1, %180, %cst_87 {dimension_numbers = #tpu.dot_dimension_numbers<[1], [0], [0], [1], [0, 0, 1, 1], [], []>} : vector<16x32xf32>, vector<32x64xf32>, vector<16x64xf32> -> vector<16x64xf32>
    %c3_88 = arith.constant 3 : index
    %c0_89 = arith.constant 0 : index
    %c0_90 = arith.constant 0 : index
    %182 = vector.load %arg8[%c3_88, %c0_89, %c0_90] : memref<5x1x64xf32, #tpu.memory_space<vmem>>, vector<1x1x64xf32>
    %183 = vector.shape_cast %182 : vector<1x1x64xf32> to vector<1x64xf32>
    %184 = vector.broadcast %183 : vector<1x64xf32> to vector<16x64xf32>
    %185 = arith.addf %181, %184 : vector<16x64xf32>
    %186 = vector.extract_strided_slice %185 {offsets = [0, 0], sizes = [16, 32], strides = [1, 1]} : vector<16x64xf32> to vector<16x32xf32>
    %187 = vector.extract_strided_slice %185 {offsets = [0, 32], sizes = [16, 32], strides = [1, 1]} : vector<16x64xf32> to vector<16x32xf32>
    %188 = arith.mulf %178, %186 : vector<16x32xf32>
    %189 = arith.addf %188, %187 : vector<16x32xf32>
    %190 = vector.broadcast %3 : vector<16x1xf32> to vector<16x32xf32>
    %191 = arith.mulf %189, %190 : vector<16x32xf32>
    %cst_91 = arith.constant 0.000000e+00 : f32
    %192 = vector.broadcast %cst_91 : f32 to vector<1x32xf32>
    %193 = tpu.concatenate %192, %191, %192 in 0 : vector<1x32xf32>, vector<16x32xf32>, vector<1x32xf32> -> vector<18x32xf32>
    %194 = vector.extract_strided_slice %193 {offsets = [0, 0], sizes = [16, 32], strides = [1, 1]} : vector<18x32xf32> to vector<16x32xf32>
    %195 = vector.extract_strided_slice %193 {offsets = [1, 0], sizes = [16, 32], strides = [1, 1]} : vector<18x32xf32> to vector<16x32xf32>
    %196 = vector.extract_strided_slice %193 {offsets = [2, 0], sizes = [16, 32], strides = [1, 1]} : vector<18x32xf32> to vector<16x32xf32>
    %197 = tpu.concatenate %194, %195, %196 in 1 : vector<16x32xf32>, vector<16x32xf32>, vector<16x32xf32> -> vector<16x96xf32>
    %c4 = arith.constant 4 : index
    %c0_92 = arith.constant 0 : index
    %c0_93 = arith.constant 0 : index
    %198 = vector.load %arg5[%c4, %c0_92, %c0_93] : memref<5x96x32xf32, #tpu.memory_space<vmem>>, vector<1x96x32xf32>
    %199 = vector.shape_cast %198 : vector<1x96x32xf32> to vector<96x32xf32>
    %cst_94 = arith.constant dense<0.000000e+00> : vector<16x32xf32>
    %200 = tpu.matmul %197, %199, %cst_94 {dimension_numbers = #tpu.dot_dimension_numbers<[1], [0], [0], [1], [0, 0, 1, 1], [], []>} : vector<16x96xf32>, vector<96x32xf32>, vector<16x32xf32> -> vector<16x32xf32>
    %c4_95 = arith.constant 4 : index
    %c0_96 = arith.constant 0 : index
    %c0_97 = arith.constant 0 : index
    %201 = vector.load %arg6[%c4_95, %c0_96, %c0_97] : memref<5x1x32xf32, #tpu.memory_space<vmem>>, vector<1x1x32xf32>
    %202 = vector.shape_cast %201 : vector<1x1x32xf32> to vector<1x32xf32>
    %203 = vector.broadcast %202 : vector<1x32xf32> to vector<16x32xf32>
    %204 = arith.addf %200, %203 : vector<16x32xf32>
    %cst_98 = arith.constant 0.000000e+00 : f32
    %205 = vector.broadcast %cst_98 : f32 to vector<16x32xf32>
    %206 = arith.maximumf %204, %205 : vector<16x32xf32>
    %cst_99 = arith.constant dense<0.000000e+00> : vector<32xf32>
    %207 = vector.multi_reduction <add>, %206, %cst_99 [0] : vector<16x32xf32> to vector<32xf32>
    %208 = vector.shape_cast %207 : vector<32xf32> to vector<1x32xf32>
    %cst_100 = arith.constant 1.600000e+01 : f32
    %209 = vector.broadcast %cst_100 : f32 to vector<1x32xf32>
    %210 = arith.divf %208, %209 : vector<1x32xf32>
    %211 = vector.broadcast %210 : vector<1x32xf32> to vector<16x32xf32>
    %212 = arith.subf %206, %211 : vector<16x32xf32>
    %213 = arith.mulf %212, %212 : vector<16x32xf32>
    %cst_101 = arith.constant dense<0.000000e+00> : vector<32xf32>
    %214 = vector.multi_reduction <add>, %213, %cst_101 [0] : vector<16x32xf32> to vector<32xf32>
    %215 = vector.shape_cast %214 : vector<32xf32> to vector<1x32xf32>
    %cst_102 = arith.constant 1.600000e+01 : f32
    %216 = vector.broadcast %cst_102 : f32 to vector<1x32xf32>
    %217 = arith.divf %215, %216 : vector<1x32xf32>
    %218 = vector.broadcast %210 : vector<1x32xf32> to vector<16x32xf32>
    %219 = arith.subf %206, %218 : vector<16x32xf32>
    %cst_103 = arith.constant 9.99999974E-6 : f32
    %220 = vector.broadcast %cst_103 : f32 to vector<1x32xf32>
    %221 = arith.addf %217, %220 : vector<1x32xf32>
    %222 = math.rsqrt %221 : vector<1x32xf32>
    %223 = vector.broadcast %222 : vector<1x32xf32> to vector<16x32xf32>
    %224 = arith.mulf %219, %223 : vector<16x32xf32>
    %c4_104 = arith.constant 4 : index
    %c0_105 = arith.constant 0 : index
    %c0_106 = arith.constant 0 : index
    %225 = vector.load %arg7[%c4_104, %c0_105, %c0_106] : memref<5x32x64xf32, #tpu.memory_space<vmem>>, vector<1x32x64xf32>
    %226 = vector.shape_cast %225 : vector<1x32x64xf32> to vector<32x64xf32>
    %cst_107 = arith.constant dense<0.000000e+00> : vector<16x64xf32>
    %227 = tpu.matmul %1, %226, %cst_107 {dimension_numbers = #tpu.dot_dimension_numbers<[1], [0], [0], [1], [0, 0, 1, 1], [], []>} : vector<16x32xf32>, vector<32x64xf32>, vector<16x64xf32> -> vector<16x64xf32>
    %c4_108 = arith.constant 4 : index
    %c0_109 = arith.constant 0 : index
    %c0_110 = arith.constant 0 : index
    %228 = vector.load %arg8[%c4_108, %c0_109, %c0_110] : memref<5x1x64xf32, #tpu.memory_space<vmem>>, vector<1x1x64xf32>
    %229 = vector.shape_cast %228 : vector<1x1x64xf32> to vector<1x64xf32>
    %230 = vector.broadcast %229 : vector<1x64xf32> to vector<16x64xf32>
    %231 = arith.addf %227, %230 : vector<16x64xf32>
    %232 = vector.extract_strided_slice %231 {offsets = [0, 0], sizes = [16, 32], strides = [1, 1]} : vector<16x64xf32> to vector<16x32xf32>
    %233 = vector.extract_strided_slice %231 {offsets = [0, 32], sizes = [16, 32], strides = [1, 1]} : vector<16x64xf32> to vector<16x32xf32>
    %234 = arith.mulf %224, %232 : vector<16x32xf32>
    %235 = arith.addf %234, %233 : vector<16x32xf32>
    %236 = vector.broadcast %3 : vector<16x1xf32> to vector<16x32xf32>
    %237 = arith.mulf %235, %236 : vector<16x32xf32>
    %c0_111 = arith.constant 0 : index
    %c0_112 = arith.constant 0 : index
    %238 = vector.load %arg9[%c0_111, %c0_112] : memref<1x32xf32, #tpu.memory_space<vmem>>, vector<1x32xf32>
    %239 = tpu.transpose %237, [1, 0] : vector<16x32xf32> -> vector<32x16xf32>
    %cst_113 = arith.constant dense<0.000000e+00> : vector<1x16xf32>
    %240 = tpu.matmul %238, %239, %cst_113 {dimension_numbers = #tpu.dot_dimension_numbers<[1], [0], [0], [1], [0, 0, 1, 1], [], []>} : vector<1x32xf32>, vector<32x16xf32>, vector<1x16xf32> -> vector<1x16xf32>
    %c0_114 = arith.constant 0 : index
    %c0_115 = arith.constant 0 : index
    %241 = vector.load %arg10[%c0_114, %c0_115] : memref<1x1xf32, #tpu.memory_space<vmem>>, vector<1x1xf32>
    %242 = vector.broadcast %241 : vector<1x1xf32> to vector<1x16xf32>
    %243 = arith.addf %240, %242 : vector<1x16xf32>
    %cst_116 = arith.constant 0.000000e+00 : f32
    %244 = vector.broadcast %cst_116 : f32 to vector<1x16xf32>
    %245 = arith.maximumf %243, %244 : vector<1x16xf32>
    %246 = math.absf %243 : vector<1x16xf32>
    %cst_117 = arith.constant 0.000000e+00 : f32
    %247 = vector.broadcast %cst_117 : f32 to vector<1x16xf32>
    %248 = arith.subf %247, %246 : vector<1x16xf32>
    %249 = math.exp %248 : vector<1x16xf32>
    %250 = math.log1p %249 : vector<1x16xf32>
    %251 = arith.addf %245, %250 : vector<1x16xf32>
    %252 = arith.mulf %251, %5 : vector<1x16xf32>
    %c0_118 = arith.constant 0 : index
    %c0_119 = arith.constant 0 : index
    %c0_120 = arith.constant 0 : index
    %253 = vector.load %arg11[%c0_118, %c0_119, %c0_120] : memref<1x1x16xf32, #tpu.memory_space<vmem>>, vector<1x1x16xf32>
    %254 = vector.shape_cast %253 : vector<1x1x16xf32> to vector<1x16xf32>
    %255 = vector.shape_cast %252 : vector<1x16xf32> to vector<1x1x16xf32>
    tpu.vector_store %arg11[%c0_118, %c0_119, %c0_120], %255 {strides = array<i32>} : memref<1x1x16xf32, #tpu.memory_space<vmem>>, vector<1x1x16xf32>,
    return
  }
  func.func @transform_0(%arg0: i32) -> (i32, i32, i32) {
    %c0_i32 = arith.constant 0 : i32
    %c0_i32_0 = arith.constant 0 : i32
    %c0_i32_1 = arith.constant 0 : i32
    return %arg0, %c0_i32, %c0_i32_0 : i32, i32, i32
  }
  func.func @transform_1(%arg0: i32) -> (i32, i32, i32) {
    %c0_i32 = arith.constant 0 : i32
    %c0_i32_0 = arith.constant 0 : i32
    %c0_i32_1 = arith.constant 0 : i32
    return %arg0, %c0_i32, %c0_i32_0 : i32, i32, i32
  }
  func.func @transform_2(%arg0: i32) -> (i32, i32, i32) {
    %c0_i32 = arith.constant 0 : i32
    %c0_i32_0 = arith.constant 0 : i32
    %c0_i32_1 = arith.constant 0 : i32
    return %arg0, %c0_i32, %c0_i32_0 : i32, i32, i32
  }
  func.func @transform_3(%arg0: i32) -> (i32, i32, i32) {
    %c0_i32 = arith.constant 0 : i32
    %c0_i32_0 = arith.constant 0 : i32
    %c0_i32_1 = arith.constant 0 : i32
    return %arg0, %c0_i32, %c0_i32_0 : i32, i32, i32
  }
  func.func @transform_4(%arg0: i32) -> (i32, i32, i32) {
    %c0_i32 = arith.constant 0 : i32
    %c0_i32_0 = arith.constant 0 : i32
    %c0_i32_1 = arith.constant 0 : i32
    %c0_i32_2 = arith.constant 0 : i32
    return %c0_i32, %c0_i32_0, %c0_i32_1 : i32, i32, i32
  }
  func.func @transform_5(%arg0: i32) -> (i32, i32, i32) {
    %c0_i32 = arith.constant 0 : i32
    %c0_i32_0 = arith.constant 0 : i32
    %c0_i32_1 = arith.constant 0 : i32
    %c0_i32_2 = arith.constant 0 : i32
    return %c0_i32, %c0_i32_0, %c0_i32_1 : i32, i32, i32
  }
  func.func @transform_6(%arg0: i32) -> (i32, i32, i32) {
    %c0_i32 = arith.constant 0 : i32
    %c0_i32_0 = arith.constant 0 : i32
    %c0_i32_1 = arith.constant 0 : i32
    %c0_i32_2 = arith.constant 0 : i32
    return %c0_i32, %c0_i32_0, %c0_i32_1 : i32, i32, i32
  }
  func.func @transform_7(%arg0: i32) -> (i32, i32, i32) {
    %c0_i32 = arith.constant 0 : i32
    %c0_i32_0 = arith.constant 0 : i32
    %c0_i32_1 = arith.constant 0 : i32
    %c0_i32_2 = arith.constant 0 : i32
    return %c0_i32, %c0_i32_0, %c0_i32_1 : i32, i32, i32
  }
  func.func @transform_8(%arg0: i32) -> (i32, i32) {
    %c0_i32 = arith.constant 0 : i32
    %c0_i32_0 = arith.constant 0 : i32
    %c0_i32_1 = arith.constant 0 : i32
    return %c0_i32, %c0_i32_0 : i32, i32
  }
  func.func @transform_9(%arg0: i32) -> (i32, i32) {
    %c0_i32 = arith.constant 0 : i32
    %c0_i32_0 = arith.constant 0 : i32
    %c0_i32_1 = arith.constant 0 : i32
    return %c0_i32, %c0_i32_0 : i32, i32
  }
  func.func @transform_10(%arg0: i32) -> (i32, i32, i32) {
    %c0_i32 = arith.constant 0 : i32
    %c0_i32_0 = arith.constant 0 : i32
    %c0_i32_1 = arith.constant 0 : i32
    return %arg0, %c0_i32, %c0_i32_0 : i32, i32, i32
  }
}

</mosaic_0001>

<llo_original>
// kernel: tpu_custom_call.1
$region0: #{tpu_custom_call.1}
  #allocation0 [shape = 'u32[]', space=smem, size = 0x4, offset = 0x4, fixed_abs, tag = 'smem constant byte address 0x4 - core index']
  #allocation1 [shape = 'u32[144,128]{1,0:T(1,128)}', space=vmem, size = 0x12000, scoped, tag = 'internal scratch']
  #allocation2 [shape = 'f32[1,1]{1,0:T(1,128)S(1)}', space=vmem, size = 0x200, scoped, tag = 'scoped memory for tpu_custom_call.1']
  %s0 = inlined_call_operand.vmem [shape: f32[2,16,32], index: 0, kind: input, shape index: {}]
  %s1 = inlined_call_operand.vmem [shape: f32[2,16,32], index: 1, kind: input, shape index: {}]
  %s2 = inlined_call_operand.vmem [shape: f32[2,16,1], index: 2, kind: input, shape index: {}]
  %s3 = inlined_call_operand.vmem [shape: f32[2,1,16], index: 3, kind: input, shape index: {}]
  %s4 = inlined_call_operand.vmem [shape: f32[5,96,32], index: 4, kind: input, shape index: {}]
  %s5 = inlined_call_operand.vmem [shape: f32[5,1,32], index: 5, kind: input, shape index: {}]
  %s6 = inlined_call_operand.vmem [shape: f32[5,32,64], index: 6, kind: input, shape index: {}]
  %s7 = inlined_call_operand.vmem [shape: f32[5,1,64], index: 7, kind: input, shape index: {}]
  %s8 = inlined_call_operand.vmem [shape: f32[1,32], index: 8, kind: input, shape index: {}]
  %s9 = inlined_call_operand.<no memory space> [shape: f32[1,1], index: 9, kind: input, shape index: {}]
  %s10 = inlined_call_operand.hbm [shape: f32[2,1,16], index: 10, kind: output, shape index: {}]
  %s11 = sld [smem:[#allocation0]]
  $region73: #{tpu_custom_call.1} parent=0
    _
  %s13 = ssub.s32 1, %s11
  %s14 = scalar_select 0, %s13, %s11
  %v15 = vstv %s9
  %16 = vst [vmem:[#allocation2] sm:$0x1] %v15
  $region1: #{tpu_custom_call.1} parent=0
    #allocation3 [shape = 'u8[1024]{0}', space=vmem, size = 0x400, scoped, tag = 'output window, operand 0']
    #allocation4 [shape = 's32[2]{0}', space=sflag, size = 0x8, scoped, tag = 'scoped memory for tpu_custom_call.1']
    %17 = vsyncpa [#allocation4], 0
    %s18 = scalar_lea.sflag [#allocation4], 1
    %19 = vsyncpa %s18, 0
    loop: start=0, step=1, limit=4
    $region2: #{tpu_custom_call.1} parent=1 // loop_pre_header
      _
    $region3: #{tpu_custom_call.1} parent=1 // loop_header
      %s21 = sphi 0, %s25
      %p22 = scmp.ge.s32.totalorder %s21, 4
      %s31 = sphi 0, %s33
      %s34 = sphi 0, %s31
      %s35 = sphi 0, %s34
      %s51 = sphi 0, %s35
      %s57 = sphi 0, %s59
      %s60 = sphi 0, %s57
      %s61 = sphi 0, %s60
      %s77 = sphi 0, %s61
      %s83 = sphi 0, %s85
      %s86 = sphi 0, %s83
      %s87 = sphi 0, %s86
      %s103 = sphi 0, %s87
      %s109 = sphi 0, %s111
      %s112 = sphi 0, %s109
      %s113 = sphi 0, %s112
      %s129 = sphi 0, %s113
      %s133 = sphi 0, %s133
      %s135 = sphi 0, %s133
      %s136 = sphi 0, %s135
      %s150 = sphi 0, %s136
      %s154 = sphi 0, %s154
      %s156 = sphi 0, %s154
      %s157 = sphi 0, %s156
      %s171 = sphi 0, %s157
      %s175 = sphi 0, %s175
      %s177 = sphi 0, %s175
      %s178 = sphi 0, %s177
      %s192 = sphi 0, %s178
      %s196 = sphi 0, %s196
      %s198 = sphi 0, %s196
      %s199 = sphi 0, %s198
      %s213 = sphi 0, %s199
      %s217 = sphi 0, %s217
      %s219 = sphi 0, %s217
      %s220 = sphi 0, %s219
      %s234 = sphi 0, %s220
      %s238 = sphi 0, %s238
      %s240 = sphi 0, %s238
      %s241 = sphi 0, %s240
      %s255 = sphi 0, %s241
      %s261 = sphi 0, %s263
      %s264 = sphi 0, %s261
      %s265 = sphi 0, %s264
      %s281 = sphi 0, %s265
    $region4: #{tpu_custom_call.1} parent=1 // loop_header_branch
      %24 = sbr.rel (%p22) target = $region8
    $region5: #{tpu_custom_call.1} parent=1 // loop_body
      %s26 = ssub.s32 %s21, 1
      %s27 = ssub.s32 %s21, 2
      %s28 = sadd.s32 %s21, 1
      %s29 = ssub.s32 %s21, %s28
      %p30 = scmp.eq.s32.totalorder %s29, 0
      %s32 = sadd.s32 %s31, 1
      %s33 = scalar_select %p30, %s31, %s32
      %p36 = pneg %p30
      %p37 = scmp.eq.s32.totalorder %s21, 1
      %p38 = por %p36, %p37
      %p39 = scmp.ne.s32.totalorder %s31, %s34
      %p40 = scmp.eq.s32.totalorder %s21, 0
      %p41 = por %p39, %p40
      %p42 = scmp.ne.s32.totalorder %s31, %s34
      %p43 = scmp.eq.s32.totalorder %s26, 1
      %p44 = por %p42, %p43
      %p45 = scmp.ne.s32.totalorder %s34, %s35
      %p46 = scmp.eq.s32.totalorder %s26, 0
      %p47 = por %p45, %p46
      %p48 = scmp.ne.s32.totalorder %s34, %s35
      %p49 = scmp.eq.s32.totalorder %s27, 1
      %p50 = por %p48, %p49
      %p52 = scmp.ne.s32.totalorder %s35, %s51
      %p53 = scmp.eq.s32.totalorder %s27, 0
      %p54 = por %p52, %p53
      %s55 = ssub.s32 %s21, %s28
      %p56 = scmp.eq.s32.totalorder %s55, 0
      %s58 = sadd.s32 %s57, 1
      %s59 = scalar_select %p56, %s57, %s58
      %p62 = pneg %p56
      %p63 = scmp.eq.s32.totalorder %s21, 1
      %p64 = por %p62, %p63
      %p65 = scmp.ne.s32.totalorder %s57, %s60
      %p66 = scmp.eq.s32.totalorder %s21, 0
      %p67 = por %p65, %p66
      %p68 = scmp.ne.s32.totalorder %s57, %s60
      %p69 = scmp.eq.s32.totalorder %s26, 1
      %p70 = por %p68, %p69
      %p71 = scmp.ne.s32.totalorder %s60, %s61
      %p72 = scmp.eq.s32.totalorder %s26, 0
      %p73 = por %p71, %p72
      %p74 = scmp.ne.s32.totalorder %s60, %s61
      %p75 = scmp.eq.s32.totalorder %s27, 1
      %p76 = por %p74, %p75
      %p78 = scmp.ne.s32.totalorder %s61, %s77
      %p79 = scmp.eq.s32.totalorder %s27, 0
      %p80 = por %p78, %p79
      %s81 = ssub.s32 %s21, %s28
      %p82 = scmp.eq.s32.totalorder %s81, 0
      %s84 = sadd.s32 %s83, 1
      %s85 = scalar_select %p82, %s83, %s84
      %p88 = pneg %p82
      %p89 = scmp.eq.s32.totalorder %s21, 1
      %p90 = por %p88, %p89
      %p91 = scmp.ne.s32.totalorder %s83, %s86
      %p92 = scmp.eq.s32.totalorder %s21, 0
      %p93 = por %p91, %p92
      %p94 = scmp.ne.s32.totalorder %s83, %s86
      %p95 = scmp.eq.s32.totalorder %s26, 1
      %p96 = por %p94, %p95
      %p97 = scmp.ne.s32.totalorder %s86, %s87
      %p98 = scmp.eq.s32.totalorder %s26, 0
      %p99 = por %p97, %p98
      %p100 = scmp.ne.s32.totalorder %s86, %s87
      %p101 = scmp.eq.s32.totalorder %s27, 1
      %p102 = por %p100, %p101
      %p104 = scmp.ne.s32.totalorder %s87, %s103
      %p105 = scmp.eq.s32.totalorder %s27, 0
      %p106 = por %p104, %p105
      %s107 = ssub.s32 %s21, %s28
      %p108 = scmp.eq.s32.totalorder %s107, 0
      %s110 = sadd.s32 %s109, 1
      %s111 = scalar_select %p108, %s109, %s110
      %p114 = pneg %p108
      %p115 = scmp.eq.s32.totalorder %s21, 1
      %p116 = por %p114, %p115
      %p117 = scmp.ne.s32.totalorder %s109, %s112
      %p118 = scmp.eq.s32.totalorder %s21, 0
      %p119 = por %p117, %p118
      %p120 = scmp.ne.s32.totalorder %s109, %s112
      %p121 = scmp.eq.s32.totalorder %s26, 1
      %p122 = por %p120, %p121
      %p123 = scmp.ne.s32.totalorder %s112, %s113
      %p124 = scmp.eq.s32.totalorder %s26, 0
      %p125 = por %p123, %p124
      %p126 = scmp.ne.s32.totalorder %s112, %s113
      %p127 = scmp.eq.s32.totalorder %s27, 1
      %p128 = por %p126, %p127
      %p130 = scmp.ne.s32.totalorder %s113, %s129
      %p131 = scmp.eq.s32.totalorder %s27, 0
      %p132 = por %p130, %p131
      %s134 = sadd.s32 %s133, 1
      %p137 = scmp.eq.s32.totalorder %s21, 1
      %p138 = scmp.ne.s32.totalorder %s133, %s135
      %p139 = scmp.eq.s32.totalorder %s21, 0
      %p140 = por %p138, %p139
      %p141 = scmp.ne.s32.totalorder %s133, %s135
      %p142 = scmp.eq.s32.totalorder %s26, 1
      %p143 = por %p141, %p142
      %p144 = scmp.ne.s32.totalorder %s135, %s136
      %p145 = scmp.eq.s32.totalorder %s26, 0
      %p146 = por %p144, %p145
      %p147 = scmp.ne.s32.totalorder %s135, %s136
      %p148 = scmp.eq.s32.totalorder %s27, 1
      %p149 = por %p147, %p148
      %p151 = scmp.ne.s32.totalorder %s136, %s150
      %p152 = scmp.eq.s32.totalorder %s27, 0
      %p153 = por %p151, %p152
      %s155 = sadd.s32 %s154, 1
      %p158 = scmp.eq.s32.totalorder %s21, 1
      %p159 = scmp.ne.s32.totalorder %s154, %s156
      %p160 = scmp.eq.s32.totalorder %s21, 0
      %p161 = por %p159, %p160
      %p162 = scmp.ne.s32.totalorder %s154, %s156
      %p163 = scmp.eq.s32.totalorder %s26, 1
      %p164 = por %p162, %p163
      %p165 = scmp.ne.s32.totalorder %s156, %s157
      %p166 = scmp.eq.s32.totalorder %s26, 0
      %p167 = por %p165, %p166
      %p168 = scmp.ne.s32.totalorder %s156, %s157
      %p169 = scmp.eq.s32.totalorder %s27, 1
      %p170 = por %p168, %p169
      %p172 = scmp.ne.s32.totalorder %s157, %s171
      %p173 = scmp.eq.s32.totalorder %s27, 0
      %p174 = por %p172, %p173
      %s176 = sadd.s32 %s175, 1
      %p179 = scmp.eq.s32.totalorder %s21, 1
      %p180 = scmp.ne.s32.totalorder %s175, %s177
      %p181 = scmp.eq.s32.totalorder %s21, 0
      %p182 = por %p180, %p181
      %p183 = scmp.ne.s32.totalorder %s175, %s177
      %p184 = scmp.eq.s32.totalorder %s26, 1
      %p185 = por %p183, %p184
      %p186 = scmp.ne.s32.totalorder %s177, %s178
      %p187 = scmp.eq.s32.totalorder %s26, 0
      %p188 = por %p186, %p187
      %p189 = scmp.ne.s32.totalorder %s177, %s178
      %p190 = scmp.eq.s32.totalorder %s27, 1
      %p191 = por %p189, %p190
      %p193 = scmp.ne.s32.totalorder %s178, %s192
      %p194 = scmp.eq.s32.totalorder %s27, 0
      %p195 = por %p193, %p194
      %s197 = sadd.s32 %s196, 1
      %p200 = scmp.eq.s32.totalorder %s21, 1
      %p201 = scmp.ne.s32.totalorder %s196, %s198
      %p202 = scmp.eq.s32.totalorder %s21, 0
      %p203 = por %p201, %p202
      %p204 = scmp.ne.s32.totalorder %s196, %s198
      %p205 = scmp.eq.s32.totalorder %s26, 1
      %p206 = por %p204, %p205
      %p207 = scmp.ne.s32.totalorder %s198, %s199
      %p208 = scmp.eq.s32.totalorder %s26, 0
      %p209 = por %p207, %p208
      %p210 = scmp.ne.s32.totalorder %s198, %s199
      %p211 = scmp.eq.s32.totalorder %s27, 1
      %p212 = por %p210, %p211
      %p214 = scmp.ne.s32.totalorder %s199, %s213
      %p215 = scmp.eq.s32.totalorder %s27, 0
      %p216 = por %p214, %p215
      %s218 = sadd.s32 %s217, 1
      %p221 = scmp.eq.s32.totalorder %s21, 1
      %p222 = scmp.ne.s32.totalorder %s217, %s219
      %p223 = scmp.eq.s32.totalorder %s21, 0
      %p224 = por %p222, %p223
      %p225 = scmp.ne.s32.totalorder %s217, %s219
      %p226 = scmp.eq.s32.totalorder %s26, 1
      %p227 = por %p225, %p226
      %p228 = scmp.ne.s32.totalorder %s219, %s220
      %p229 = scmp.eq.s32.totalorder %s26, 0
      %p230 = por %p228, %p229
      %p231 = scmp.ne.s32.totalorder %s219, %s220
      %p232 = scmp.eq.s32.totalorder %s27, 1
      %p233 = por %p231, %p232
      %p235 = scmp.ne.s32.totalorder %s220, %s234
      %p236 = scmp.eq.s32.totalorder %s27, 0
      %p237 = por %p235, %p236
      %s239 = sadd.s32 %s238, 1
      %p242 = scmp.eq.s32.totalorder %s21, 1
      %p243 = scmp.ne.s32.totalorder %s238, %s240
      %p244 = scmp.eq.s32.totalorder %s21, 0
      %p245 = por %p243, %p244
      %p246 = scmp.ne.s32.totalorder %s238, %s240
      %p247 = scmp.eq.s32.totalorder %s26, 1
      %p248 = por %p246, %p247
      %p249 = scmp.ne.s32.totalorder %s240, %s241
      %p250 = scmp.eq.s32.totalorder %s26, 0
      %p251 = por %p249, %p250
      %p252 = scmp.ne.s32.totalorder %s240, %s241
      %p253 = scmp.eq.s32.totalorder %s27, 1
      %p254 = por %p252, %p253
      %p256 = scmp.ne.s32.totalorder %s241, %s255
      %p257 = scmp.eq.s32.totalorder %s27, 0
      %p258 = por %p256, %p257
      %s259 = ssub.s32 %s21, %s28
      %p260 = scmp.eq.s32.totalorder %s259, 0
      %s262 = sadd.s32 %s261, 1
      %s263 = scalar_select %p260, %s261, %s262
      %p266 = pneg %p260
      %p267 = scmp.eq.s32.totalorder %s21, 1
      %p268 = por %p266, %p267
      %p269 = scmp.ne.s32.totalorder %s261, %s264
      %p270 = scmp.eq.s32.totalorder %s21, 0
      %p271 = por %p269, %p270
      %p272 = scmp.ne.s32.totalorder %s261, %s264
      %p273 = scmp.eq.s32.totalorder %s26, 1
      %p274 = por %p272, %p273
      %p275 = scmp.ne.s32.totalorder %s264, %s265
      %p276 = scmp.eq.s32.totalorder %s26, 0
      %p277 = por %p275, %p276
      %p278 = scmp.ne.s32.totalorder %s264, %s265
      %p279 = scmp.eq.s32.totalorder %s27, 1
      %p280 = por %p278, %p279
      %p282 = scmp.ne.s32.totalorder %s265, %s281
      %p283 = scmp.eq.s32.totalorder %s27, 0
      %p284 = por %p282, %p283
      %p285 = scmp.le.s32.totalorder 1, %s21
      %p286 = scmp.lt.s32.totalorder %s21, 3
      %p287 = pnand %p285, %p286
      %p288 = pneg %p287
      // Predicated region
      $region9: #{tpu_custom_call.1} parent=5 // pred_check
        _
      $region10: #{tpu_custom_call.1} parent=5 // pred_check_branch
        %290 = sbr.rel (%p287) target = $region12
      $region11: #{tpu_custom_call.1} parent=5 // pred_region
        %s291 = ssub.s32 %s21, 1
        // Predicated region
        $region13: #{tpu_custom_call.1} parent=11 // pred_check
          %p292 = pneg %p146
        $region14: #{tpu_custom_call.1} parent=11 // pred_check_branch
          %294 = sbr.rel (%p292) target = $region16
        $region15: #{tpu_custom_call.1} parent=11 // pred_region
          _
        $region16: #{tpu_custom_call.1} parent=11 // pred_fallthru
          _
        // Predicated region
        $region17: #{tpu_custom_call.1} parent=11 // pred_check
          %p295 = pneg %p167
        $region18: #{tpu_custom_call.1} parent=11 // pred_check_branch
          %297 = sbr.rel (%p295) target = $region20
        $region19: #{tpu_custom_call.1} parent=11 // pred_region
          _
        $region20: #{tpu_custom_call.1} parent=11 // pred_fallthru
          _
        // Predicated region
        $region21: #{tpu_custom_call.1} parent=11 // pred_check
          %p298 = pneg %p188
        $region22: #{tpu_custom_call.1} parent=11 // pred_check_branch
          %300 = sbr.rel (%p298) target = $region24
        $region23: #{tpu_custom_call.1} parent=11 // pred_region
          _
        $region24: #{tpu_custom_call.1} parent=11 // pred_fallthru
          _
        // Predicated region
        $region25: #{tpu_custom_call.1} parent=11 // pred_check
          %p301 = pneg %p209
        $region26: #{tpu_custom_call.1} parent=11 // pred_check_branch
          %303 = sbr.rel (%p301) target = $region28
        $region27: #{tpu_custom_call.1} parent=11 // pred_region
          _
        $region28: #{tpu_custom_call.1} parent=11 // pred_fallthru
          _
        // Predicated region
        $region29: #{tpu_custom_call.1} parent=11 // pred_check
          %p304 = pneg %p230
        $region30: #{tpu_custom_call.1} parent=11 // pred_check_branch
          %306 = sbr.rel (%p304) target = $region32
        $region31: #{tpu_custom_call.1} parent=11 // pred_region
          _
        $region32: #{tpu_custom_call.1} parent=11 // pred_fallthru
          _
        // Predicated region
        $region33: #{tpu_custom_call.1} parent=11 // pred_check
          %p307 = pneg %p251
        $region34: #{tpu_custom_call.1} parent=11 // pred_check_branch
          %309 = sbr.rel (%p307) target = $region36
        $region35: #{tpu_custom_call.1} parent=11 // pred_region
          _
        $region36: #{tpu_custom_call.1} parent=11 // pred_fallthru
          _
      $region12: #{tpu_custom_call.1} parent=5 // pred_fallthru
        _
      %p310 = scmp.lt.s32.totalorder %s21, 2
      // Predicated region
      $region37: #{tpu_custom_call.1} parent=5 // pred_check
        %p311 = pneg %p310
      $region38: #{tpu_custom_call.1} parent=5 // pred_check_branch
        %313 = sbr.rel (%p311) target = $region40
      $region39: #{tpu_custom_call.1} parent=5 // pred_region
        // Predicated region
        $region41: #{tpu_custom_call.1} parent=39 // pred_check
          %p314 = pneg %p41
        $region42: #{tpu_custom_call.1} parent=39 // pred_check_branch
          %316 = sbr.rel (%p314) target = $region44
        $region43: #{tpu_custom_call.1} parent=39 // pred_region
          %p317 = scmp.lt.s32.totalorder %s21, 1
          %s318 = scalar_select %p317, %s21, 1
          %s319 = smul.addr %s318, 2
          %s320 = smul.addr %s319, 8
          %s321 = scalar_lea.vmem %s0, %s320
        $region44: #{tpu_custom_call.1} parent=39 // pred_fallthru
          _
        // Predicated region
        $region45: #{tpu_custom_call.1} parent=39 // pred_check
          %p322 = pneg %p67
        $region46: #{tpu_custom_call.1} parent=39 // pred_check_branch
          %324 = sbr.rel (%p322) target = $region48
        $region47: #{tpu_custom_call.1} parent=39 // pred_region
          %p325 = scmp.lt.s32.totalorder %s21, 1
          %s326 = scalar_select %p325, %s21, 1
          %s327 = smul.addr %s326, 2
          %s328 = smul.addr %s327, 8
          %s329 = scalar_lea.vmem %s1, %s328
        $region48: #{tpu_custom_call.1} parent=39 // pred_fallthru
          _
        // Predicated region
        $region49: #{tpu_custom_call.1} parent=39 // pred_check
          %p330 = pneg %p93
        $region50: #{tpu_custom_call.1} parent=39 // pred_check_branch
          %332 = sbr.rel (%p330) target = $region52
        $region51: #{tpu_custom_call.1} parent=39 // pred_region
          %p333 = scmp.lt.s32.totalorder %s21, 1
          %s334 = scalar_select %p333, %s21, 1
          %s335 = smul.addr %s334, 2
          %s336 = smul.addr %s335, 8
          %s337 = scalar_lea.vmem %s2, %s336
        $region52: #{tpu_custom_call.1} parent=39 // pred_fallthru
          _
        // Predicated region
        $region53: #{tpu_custom_call.1} parent=39 // pred_check
          %p338 = pneg %p119
        $region54: #{tpu_custom_call.1} parent=39 // pred_check_branch
          %340 = sbr.rel (%p338) target = $region56
        $region55: #{tpu_custom_call.1} parent=39 // pred_region
          %p341 = scmp.lt.s32.totalorder %s21, 1
          %s342 = scalar_select %p341, %s21, 1
          %s343 = scalar_lea.vmem %s3, %s342
        $region56: #{tpu_custom_call.1} parent=39 // pred_fallthru
          _
      $region40: #{tpu_custom_call.1} parent=5 // pred_fallthru
        _
      %p344 = scmp.le.s32.totalorder 1, %s21
      %p345 = scmp.lt.s32.totalorder %s21, 3
      %p346 = pnand %p344, %p345
      %p347 = pneg %p346
      // Predicated region
      $region57: #{tpu_custom_call.1} parent=5 // pred_check
        _
      $region58: #{tpu_custom_call.1} parent=5 // pred_check_branch
        %349 = sbr.rel (%p346) target = $region60
      $region59: #{tpu_custom_call.1} parent=5 // pred_region
        %s350 = ssub.s32 %s21, 1
        %p351 = scmp.lt.s32.totalorder %s26, 1
        %s352 = scalar_select %p351, %s26, 1
        %s353 = smul.addr %s352, 2
        %s354 = smul.addr %s353, 8
        %s355 = scalar_lea.vmem %s0, %s354
        %p356 = pneg %p47
        %p357 = pneg %p44
        %p358 = scmp.lt.s32.totalorder %s26, 1
        %s359 = scalar_select %p358, %s26, 1
        %s360 = smul.addr %s359, 2
        %s361 = smul.addr %s360, 8
        %s362 = scalar_lea.vmem %s1, %s361
        %p363 = pneg %p73
        %p364 = pneg %p70
        %p365 = scmp.lt.s32.totalorder %s26, 1
        %s366 = scalar_select %p365, %s26, 1
        %s367 = smul.addr %s366, 2
        %s368 = smul.addr %s367, 8
        %s369 = scalar_lea.vmem %s2, %s368
        %p370 = pneg %p99
        %p371 = pneg %p96
        %p372 = scmp.lt.s32.totalorder %s26, 1
        %s373 = scalar_select %p372, %s26, 1
        %s374 = scalar_lea.vmem %s3, %s373
        %p375 = pneg %p125
        %p376 = pneg %p122
        %p377 = pneg %p146
        %p378 = pneg %p143
        %p379 = pneg %p167
        %p380 = pneg %p164
        %p381 = pneg %p188
        %p382 = pneg %p185
        %p383 = pneg %p209
        %p384 = pneg %p206
        %p385 = pneg %p230
        %p386 = pneg %p227
        %p387 = pneg %p251
        %p388 = pneg %p248
        %p389 = pneg %p277
        %p390 = pneg %p274
        %s391 = sand.u32 %s264, 1
        %s392 = scalar_lea.sflag [#allocation4], %s391
        %s393 = sand.u32 %s264, 1
        %s394 = scalar_lea.vmem [#allocation3], %s393
        %p395 = scmp.lt.s32.totalorder %s26, 1
        %s396 = scalar_select %p395, %s26, 1
        %s397 = smul.addr %s396, 2
        %s398 = smul.addr %s397, 8
        %s399 = scalar_lea.vmem %s0, %s398
        %p400 = scmp.lt.s32.totalorder %s26, 1
        %s401 = scalar_select %p400, %s26, 1
        %s402 = smul.addr %s401, 2
        %s403 = smul.addr %s402, 8
        %s404 = scalar_lea.vmem %s1, %s403
        %p405 = scmp.lt.s32.totalorder %s26, 1
        %s406 = scalar_select %p405, %s26, 1
        %s407 = smul.addr %s406, 2
        %s408 = smul.addr %s407, 8
        %s409 = scalar_lea.vmem %s2, %s408
        %p410 = scmp.lt.s32.totalorder %s26, 1
        %s411 = scalar_select %p410, %s26, 1
        %s412 = scalar_lea.vmem %s3, %s411
        %v413 = vld [vmem:[%s404] sm:$0xff]
        %v414 = vld [vmem:[%s404 + $0x8] sm:$0xff]
        %v415 = vld [vmem:[%s409] sm:$0xff]
        %v416 = vld [vmem:[%s409 + $0x8] sm:$0xff]
        %v417 = vld [vmem:[%s412] sm:$0x1]
        %v418 = vld [vmem:[%s399] sm:$0xff]
        %v419 = vld [vmem:[%s399 + $0x8] sm:$0xff]
        %vm422 = vcmask 1040384
        %v423 = vrot.slane %v418, 7
        %v424 = vrot.slane %v419, 7
        %v425 = vsel %vm422, %v423, %v424
        %v429 = vsel %vm422, 0.0, %v423
        %v430 = vsel %vm422, %v424, 0.0
        %vm433 = vcmask 1046528
        %v434 = vrot.slane %v429, 1
        %v435 = vrot.slane %v425, 1
        %v436 = vsel %vm433, %v434, %v435
        %v437 = vrot.slane %v430, 1
        %v438 = vsel %vm433, %v435, %v437
        %439 = vrot.lane.b32.xlu0 %v436, 32
        %v440 = vpop.permute.xlu0 %439
        %441 = vrot.lane.b32.xlu0 %v438, 32
        %v442 = vpop.permute.xlu0 %441
        %vm445 = vcmask 1045504
        %v446 = vrot.slane %v429, 2
        %v447 = vrot.slane %v425, 2
        %v448 = vsel %vm445, %v446, %v447
        %v449 = vrot.slane %v430, 2
        %v450 = vsel %vm445, %v447, %v449
        %451 = vrot.lane.b32.xlu0 %v448, 64
        %v452 = vpop.permute.xlu0 %451
        %453 = vrot.lane.b32.xlu0 %v450, 64
        %v454 = vpop.permute.xlu0 %453
        %vm457 = vcmask 261120
        %v458 = vsel %vm457, %v429, %v440
        %v459 = vsel %vm457, %v425, %v442
        %vm460 = vcmask 523264
        %v461 = vsel %vm460, %v458, %v452
        %v462 = vsel %vm460, %v459, %v454
        %v463 = vld [vmem:[%s4] sm:$0xff]
        %v464 = vld [vmem:[%s4 + $0x8] sm:$0xff]
        %v465 = vld [vmem:[%s4 + $0x10] sm:$0xff]
        %v466 = vld [vmem:[%s4 + $0x18] sm:$0xff]
        %v467 = vld [vmem:[%s4 + $0x20] sm:$0xff]
        %v468 = vld [vmem:[%s4 + $0x28] sm:$0xff]
        %v469 = vld [vmem:[%s4 + $0x30] sm:$0xff]
        %v470 = vld [vmem:[%s4 + $0x38] sm:$0xff]
        %v471 = vld [vmem:[%s4 + $0x40] sm:$0xff]
        %v472 = vld [vmem:[%s4 + $0x48] sm:$0xff]
        %v473 = vld [vmem:[%s4 + $0x50] sm:$0xff]
        %v474 = vld [vmem:[%s4 + $0x58] sm:$0xff]
        %v475 = vld [vmem:[%s5] sm:$0x1]
        %v477 = vlaneseq
        %v478 = vshrl.u32 %v477, 7
        %v479 = vsub.s32 0, %v478
        %v480 = vrot.slane %v475, %v479
        %vm482 = vcmask 785408
        %v484 = vsel %vm482, %v461, 0
        %v487 = vsel %vm482, %v462, 0
        %489 = vmatprep.subr.mxu0 0.0
        %490 = vmatpush1.msra.mxu0 0.0
        %491 = vmatprep.subr.mxu0 0.0
        %492 = vmatpush1.msra.mxu0 0.0
        %493 = vmatprep.subr.mxu0 0.0
        %494 = vmatpush1.msra.mxu0 0.0
        %495 = vmatprep.subr.mxu0 0.0
        %496 = vmatpush1.msra.mxu0 0.0
        %497 = vmatprep.subr.mxu0 0.0
        %498 = vmatpush1.msra.mxu0 %v474
        %499 = vmatprep.subr.mxu0 0.0
        %500 = vmatpush1.msra.mxu0 %v473
        %501 = vmatprep.subr.mxu0 0.0
        %502 = vmatpush1.msra.mxu0 %v472
        %503 = vmatprep.subr.mxu0 0.0
        %504 = vmatpush1.msra.mxu0 %v471
        %505 = vmatprep.subr.mxu0 0.0
        %506 = vmatpush1.msra.mxu0 %v470
        %507 = vmatprep.subr.mxu0 0.0
        %508 = vmatpush1.msra.mxu0 %v469
        %509 = vmatprep.subr.mxu0 0.0
        %510 = vmatpush1.msra.mxu0 %v468
        %511 = vmatprep.subr.mxu0 0.0
        %512 = vmatpush1.msra.mxu0 %v467
        %513 = vmatprep.subr.mxu0 0.0
        %514 = vmatpush1.msra.mxu0 %v466
        %515 = vmatprep.subr.mxu0 0.0
        %516 = vmatpush1.msra.mxu0 %v465
        %517 = vmatprep.subr.mxu0 0.0
        %518 = vmatpush1.msra.mxu0 %v464
        %519 = vmatprep.subr.mxu0 0.0
        %520 = vmatpush1.msra.mxu0 %v463
        %521 = vmatprep.subr.mxu0 0.0
        %522 = vmatpush2.msra.mxu0 0.0
        %523 = vmatprep.subr.mxu0 0.0
        %524 = vmatpush2.msra.mxu0 0.0
        %525 = vmatprep.subr.mxu0 0.0
        %526 = vmatpush2.msra.mxu0 0.0
        %527 = vmatprep.subr.mxu0 0.0
        %528 = vmatpush2.msra.mxu0 0.0
        %529 = vmatprep.subr.mxu0 0.0
        %530 = vmatpush2.msra.mxu0 0.0
        %531 = vmatprep.subr.mxu0 0.0
        %532 = vmatpush2.msra.mxu0 0.0
        %533 = vmatprep.subr.mxu0 0.0
        %534 = vmatpush2.msra.mxu0 0.0
        %535 = vmatprep.subr.mxu0 0.0
        %536 = vmatpush2.msra.mxu0 0.0
        %537 = vmatprep.subr.mxu0 0.0
        %538 = vmatpush2.msra.mxu0 0.0
        %539 = vmatprep.subr.mxu0 0.0
        %540 = vmatpush2.msra.mxu0 0.0
        %541 = vmatprep.subr.mxu0 0.0
        %542 = vmatpush2.msra.mxu0 0.0
        %543 = vmatprep.subr.mxu0 0.0
        %544 = vmatpush2.msra.mxu0 0.0
        %545 = vmatprep.subr.mxu0 0.0
        %546 = vmatpush2.msra.mxu0 0.0
        %547 = vmatprep.subr.mxu0 0.0
        %548 = vmatpush2.msra.mxu0 0.0
        %549 = vmatprep.subr.mxu0 0.0
        %550 = vmatpush2.msra.mxu0 0.0
        %551 = vmatprep.subr.mxu0 0.0
        %552 = vmatpush2.msra.mxu0 0.0
        %553 = vmatprep.mubr.f32.mxu0 0.0
        %554 = vmatmul.mubr.f32.gmra.mxu0 %v484
        %v555 = vpop.f32.mrf.mxu0
        %v556 = vadd.f32 %v480, %v555
        %v557 = vpop.f32.mrf.mxu0
        %558 = vmatprep.mubr.f32.mxu0 0.0
        %559 = vmatmul.mubr.f32.gmra.mxu0 %v487
        %v560 = vpop.f32.mrf.mxu0
        %v561 = vadd.f32 %v480, %v560
        %v562 = vpop.f32.mrf.mxu0
        %563 = vdwg.mxu0
        %v564 = vmax.f32 %v556, 0.0
        %v565 = vmax.f32 %v561, 0.0
        %v566 = vsel %vm457, %v564, 0.0
        %v567 = vsel %vm457, %v565, 0.0
        %v568 = vadd.f32 %v566, %v567
        %v569 = vrot.slane %v568, 4
        %v570 = vadd.f32 %v568, %v569
        %v571 = vrot.slane %v570, 2
        %v572 = vadd.f32 %v570, %v571
        %v573 = vrot.slane %v572, 1
        %v574 = vadd.f32 %v572, %v573
        %v575 = vrcp.pop 16.0
        %v576 = vmul.f32 %v574, %v575
        %v577 = vsub.f32 %v564, %v576
        %v578 = vsub.f32 %v565, %v576
        %v579 = vmul.f32 %v577, %v577
        %v580 = vmul.f32 %v578, %v578
        %v581 = vsel %vm457, %v579, 0.0
        %v582 = vsel %vm457, %v580, 0.0
        %v583 = vadd.f32 %v581, %v582
        %v584 = vrot.slane %v583, 4
        %v585 = vadd.f32 %v583, %v584
        %v586 = vrot.slane %v585, 2
        %v587 = vadd.f32 %v585, %v586
        %v588 = vrot.slane %v587, 1
        %v589 = vadd.f32 %v587, %v588
        %v590 = vmul.f32 %v589, %v575
        %v591 = vadd.f32 %v590, 1e-05
        %v592 = vrsqrt.pop %v591
        %v593 = vmul.f32 %v577, %v592
        %v594 = vmul.f32 %v578, %v592
        %v595 = vld [vmem:[%s6] sm:$0xff]
        %v596 = vld [vmem:[%s6 + $0x8] sm:$0xff]
        %v597 = vld [vmem:[%s6 + $0x10] sm:$0xff]
        %v598 = vld [vmem:[%s6 + $0x18] sm:$0xff]
        %v599 = vld [vmem:[%s7] sm:$0x1]
        %v601 = vlaneseq
        %v602 = vshrl.u32 %v601, 7
        %v603 = vsub.s32 0, %v602
        %v604 = vrot.slane %v599, %v603
        %v607 = vsel %vm457, %v413, 0
        %v610 = vsel %vm457, %v414, 0
        %612 = vmatprep.subr.mxu0 0.0
        %613 = vmatpush1.msra.mxu0 0.0
        %614 = vmatprep.subr.mxu0 0.0
        %615 = vmatpush1.msra.mxu0 0.0
        %616 = vmatprep.subr.mxu0 0.0
        %617 = vmatpush1.msra.mxu0 0.0
        %618 = vmatprep.subr.mxu0 0.0
        %619 = vmatpush1.msra.mxu0 0.0
        %620 = vmatprep.subr.mxu0 0.0
        %621 = vmatpush1.msra.mxu0 0.0
        %622 = vmatprep.subr.mxu0 0.0
        %623 = vmatpush1.msra.mxu0 0.0
        %624 = vmatprep.subr.mxu0 0.0
        %625 = vmatpush1.msra.mxu0 0.0
        %626 = vmatprep.subr.mxu0 0.0
        %627 = vmatpush1.msra.mxu0 0.0
        %628 = vmatprep.subr.mxu0 0.0
        %629 = vmatpush1.msra.mxu0 0.0
        %630 = vmatprep.subr.mxu0 0.0
        %631 = vmatpush1.msra.mxu0 0.0
        %632 = vmatprep.subr.mxu0 0.0
        %633 = vmatpush1.msra.mxu0 0.0
        %634 = vmatprep.subr.mxu0 0.0
        %635 = vmatpush1.msra.mxu0 0.0
        %636 = vmatprep.subr.mxu0 0.0
        %637 = vmatpush1.msra.mxu0 %v598
        %638 = vmatprep.subr.mxu0 0.0
        %639 = vmatpush1.msra.mxu0 %v597
        %640 = vmatprep.subr.mxu0 0.0
        %641 = vmatpush1.msra.mxu0 %v596
        %642 = vmatprep.subr.mxu0 0.0
        %643 = vmatpush1.msra.mxu0 %v595
        %644 = vmatprep.subr.mxu0 0.0
        %645 = vmatpush2.msra.mxu0 0.0
        %646 = vmatprep.subr.mxu0 0.0
        %647 = vmatpush2.msra.mxu0 0.0
        %648 = vmatprep.subr.mxu0 0.0
        %649 = vmatpush2.msra.mxu0 0.0
        %650 = vmatprep.subr.mxu0 0.0
        %651 = vmatpush2.msra.mxu0 0.0
        %652 = vmatprep.subr.mxu0 0.0
        %653 = vmatpush2.msra.mxu0 0.0
        %654 = vmatprep.subr.mxu0 0.0
        %655 = vmatpush2.msra.mxu0 0.0
        %656 = vmatprep.subr.mxu0 0.0
        %657 = vmatpush2.msra.mxu0 0.0
        %658 = vmatprep.subr.mxu0 0.0
        %659 = vmatpush2.msra.mxu0 0.0
        %660 = vmatprep.subr.mxu0 0.0
        %661 = vmatpush2.msra.mxu0 0.0
        %662 = vmatprep.subr.mxu0 0.0
        %663 = vmatpush2.msra.mxu0 0.0
        %664 = vmatprep.subr.mxu0 0.0
        %665 = vmatpush2.msra.mxu0 0.0
        %666 = vmatprep.subr.mxu0 0.0
        %667 = vmatpush2.msra.mxu0 0.0
        %668 = vmatprep.subr.mxu0 0.0
        %669 = vmatpush2.msra.mxu0 0.0
        %670 = vmatprep.subr.mxu0 0.0
        %671 = vmatpush2.msra.mxu0 0.0
        %672 = vmatprep.subr.mxu0 0.0
        %673 = vmatpush2.msra.mxu0 0.0
        %674 = vmatprep.subr.mxu0 0.0
        %675 = vmatpush2.msra.mxu0 0.0
        %676 = vmatprep.mubr.f32.mxu0 0.0
        %677 = vmatmul.mubr.f32.gmra.mxu0 %v607
        %v678 = vpop.f32.mrf.mxu0
        %v679 = vadd.f32 %v604, %v678
        %v680 = vpop.f32.mrf.mxu0
        %681 = vmatprep.mubr.f32.mxu0 0.0
        %682 = vmatmul.mubr.f32.gmra.mxu0 %v610
        %v683 = vpop.f32.mrf.mxu0
        %v684 = vadd.f32 %v604, %v683
        %v685 = vpop.f32.mrf.mxu0
        %686 = vdwg.mxu0
        %v687 = vmul.f32 %v593, %v679
        %v688 = vmul.f32 %v594, %v684
        %691 = vrot.lane.b32.xlu0 %v679, 96
        %v692 = vpop.permute.xlu0 %691
        %693 = vrot.lane.b32.xlu0 %v684, 96
        %v694 = vpop.permute.xlu0 %693
        %v697 = vadd.f32 %v687, %v692
        %v698 = vadd.f32 %v688, %v694
        %700 = vset.pattern.permute.xlu0 0
        %701 = vperm.xlu0 %700, %v415
        %v702 = vpop.permute.xlu0 %701
        %705 = vset.pattern.permute.xlu0 0
        %706 = vperm.xlu0 %705, %v416
        %v707 = vpop.permute.xlu0 %706
        %v709 = vmul.f32 %v697, %v702
        %v710 = vmul.f32 %v698, %v707
        %v713 = vrot.slane %v709, 7
        %v714 = vrot.slane %v710, 7
        %v715 = vsel %vm422, %v713, %v714
        %v719 = vsel %vm422, 0.0, %v713
        %v720 = vsel %vm422, %v714, 0.0
        %v723 = vrot.slane %v719, 1
        %v724 = vrot.slane %v715, 1
        %v725 = vsel %vm433, %v723, %v724
        %v726 = vrot.slane %v720, 1
        %v727 = vsel %vm433, %v724, %v726
        %728 = vrot.lane.b32.xlu0 %v725, 32
        %v729 = vpop.permute.xlu0 %728
        %730 = vrot.lane.b32.xlu0 %v727, 32
        %v731 = vpop.permute.xlu0 %730
        %v734 = vrot.slane %v719, 2
        %v735 = vrot.slane %v715, 2
        %v736 = vsel %vm445, %v734, %v735
        %v737 = vrot.slane %v720, 2
        %v738 = vsel %vm445, %v735, %v737
        %739 = vrot.lane.b32.xlu0 %v736, 64
        %v740 = vpop.permute.xlu0 %739
        %741 = vrot.lane.b32.xlu0 %v738, 64
        %v742 = vpop.permute.xlu0 %741
        %v745 = vsel %vm457, %v719, %v729
        %v746 = vsel %vm457, %v715, %v731
        %v747 = vsel %vm460, %v745, %v740
        %v748 = vsel %vm460, %v746, %v742
        %s749 = scalar_lea.vmem %s4, 96
        %v750 = vld [vmem:[%s749] sm:$0xff]
        %v751 = vld [vmem:[%s749 + $0x8] sm:$0xff]
        %v752 = vld [vmem:[%s749 + $0x10] sm:$0xff]
        %v753 = vld [vmem:[%s749 + $0x18] sm:$0xff]
        %v754 = vld [vmem:[%s749 + $0x20] sm:$0xff]
        %v755 = vld [vmem:[%s749 + $0x28] sm:$0xff]
        %v756 = vld [vmem:[%s749 + $0x30] sm:$0xff]
        %v757 = vld [vmem:[%s749 + $0x38] sm:$0xff]
        %v758 = vld [vmem:[%s749 + $0x40] sm:$0xff]
        %v759 = vld [vmem:[%s749 + $0x48] sm:$0xff]
        %v760 = vld [vmem:[%s749 + $0x50] sm:$0xff]
        %v761 = vld [vmem:[%s749 + $0x58] sm:$0xff]
        %s762 = scalar_lea.vmem %s5, 1
        %v763 = vld [vmem:[%s762] sm:$0x1]
        %v765 = vlaneseq
        %v766 = vshrl.u32 %v765, 7
        %v767 = vsub.s32 0, %v766
        %v768 = vrot.slane %v763, %v767
        %v771 = vsel %vm482, %v747, 0
        %v774 = vsel %vm482, %v748, 0
        %776 = vmatprep.subr.mxu0 0.0
        %777 = vmatpush1.msra.mxu0 0.0
        %778 = vmatprep.subr.mxu0 0.0
        %779 = vmatpush1.msra.mxu0 0.0
        %780 = vmatprep.subr.mxu0 0.0
        %781 = vmatpush1.msra.mxu0 0.0
        %782 = vmatprep.subr.mxu0 0.0
        %783 = vmatpush1.msra.mxu0 0.0
        %784 = vmatprep.subr.mxu0 0.0
        %785 = vmatpush1.msra.mxu0 %v761
        %786 = vmatprep.subr.mxu0 0.0
        %787 = vmatpush1.msra.mxu0 %v760
        %788 = vmatprep.subr.mxu0 0.0
        %789 = vmatpush1.msra.mxu0 %v759
        %790 = vmatprep.subr.mxu0 0.0
        %791 = vmatpush1.msra.mxu0 %v758
        %792 = vmatprep.subr.mxu0 0.0
        %793 = vmatpush1.msra.mxu0 %v757
        %794 = vmatprep.subr.mxu0 0.0
        %795 = vmatpush1.msra.mxu0 %v756
        %796 = vmatprep.subr.mxu0 0.0
        %797 = vmatpush1.msra.mxu0 %v755
        %798 = vmatprep.subr.mxu0 0.0
        %799 = vmatpush1.msra.mxu0 %v754
        %800 = vmatprep.subr.mxu0 0.0
        %801 = vmatpush1.msra.mxu0 %v753
        %802 = vmatprep.subr.mxu0 0.0
        %803 = vmatpush1.msra.mxu0 %v752
        %804 = vmatprep.subr.mxu0 0.0
        %805 = vmatpush1.msra.mxu0 %v751
        %806 = vmatprep.subr.mxu0 0.0
        %807 = vmatpush1.msra.mxu0 %v750
        %808 = vmatprep.subr.mxu0 0.0
        %809 = vmatpush2.msra.mxu0 0.0
        %810 = vmatprep.subr.mxu0 0.0
        %811 = vmatpush2.msra.mxu0 0.0
        %812 = vmatprep.subr.mxu0 0.0
        %813 = vmatpush2.msra.mxu0 0.0
        %814 = vmatprep.subr.mxu0 0.0
        %815 = vmatpush2.msra.mxu0 0.0
        %816 = vmatprep.subr.mxu0 0.0
        %817 = vmatpush2.msra.mxu0 0.0
        %818 = vmatprep.subr.mxu0 0.0
        %819 = vmatpush2.msra.mxu0 0.0
        %820 = vmatprep.subr.mxu0 0.0
        %821 = vmatpush2.msra.mxu0 0.0
        %822 = vmatprep.subr.mxu0 0.0
        %823 = vmatpush2.msra.mxu0 0.0
        %824 = vmatprep.subr.mxu0 0.0
        %825 = vmatpush2.msra.mxu0 0.0
        %826 = vmatprep.subr.mxu0 0.0
        %827 = vmatpush2.msra.mxu0 0.0
        %828 = vmatprep.subr.mxu0 0.0
        %829 = vmatpush2.msra.mxu0 0.0
        %830 = vmatprep.subr.mxu0 0.0
        %831 = vmatpush2.msra.mxu0 0.0
        %832 = vmatprep.subr.mxu0 0.0
        %833 = vmatpush2.msra.mxu0 0.0
        %834 = vmatprep.subr.mxu0 0.0
        %835 = vmatpush2.msra.mxu0 0.0
        %836 = vmatprep.subr.mxu0 0.0
        %837 = vmatpush2.msra.mxu0 0.0
        %838 = vmatprep.subr.mxu0 0.0
        %839 = vmatpush2.msra.mxu0 0.0
        %840 = vmatprep.mubr.f32.mxu0 0.0
        %841 = vmatmul.mubr.f32.gmra.mxu0 %v771
        %v842 = vpop.f32.mrf.mxu0
        %v843 = vadd.f32 %v768, %v842
        %v844 = vpop.f32.mrf.mxu0
        %845 = vmatprep.mubr.f32.mxu0 0.0
        %846 = vmatmul.mubr.f32.gmra.mxu0 %v774
        %v847 = vpop.f32.mrf.mxu0
        %v848 = vadd.f32 %v768, %v847
        %v849 = vpop.f32.mrf.mxu0
        %850 = vdwg.mxu0
        %v851 = vmax.f32 %v843, 0.0
        %v852 = vmax.f32 %v848, 0.0
        %v853 = vsel %vm457, %v851, 0.0
        %v854 = vsel %vm457, %v852, 0.0
        %v855 = vadd.f32 %v853, %v854
        %v856 = vrot.slane %v855, 4
        %v857 = vadd.f32 %v855, %v856
        %v858 = vrot.slane %v857, 2
        %v859 = vadd.f32 %v857, %v858
        %v860 = vrot.slane %v859, 1
        %v861 = vadd.f32 %v859, %v860
        %v862 = vmul.f32 %v861, %v575
        %v863 = vsub.f32 %v851, %v862
        %v864 = vsub.f32 %v852, %v862
        %v865 = vmul.f32 %v863, %v863
        %v866 = vmul.f32 %v864, %v864
        %v867 = vsel %vm457, %v865, 0.0
        %v868 = vsel %vm457, %v866, 0.0
        %v869 = vadd.f32 %v867, %v868
        %v870 = vrot.slane %v869, 4
        %v871 = vadd.f32 %v869, %v870
        %v872 = vrot.slane %v871, 2
        %v873 = vadd.f32 %v871, %v872
        %v874 = vrot.slane %v873, 1
        %v875 = vadd.f32 %v873, %v874
        %v876 = vmul.f32 %v875, %v575
        %v877 = vadd.f32 %v876, 1e-05
        %v878 = vrsqrt.pop %v877
        %v879 = vmul.f32 %v863, %v878
        %v880 = vmul.f32 %v864, %v878
        %s881 = scalar_lea.vmem %s6, 32
        %v882 = vld [vmem:[%s881] sm:$0xff]
        %v883 = vld [vmem:[%s881 + $0x8] sm:$0xff]
        %v884 = vld [vmem:[%s881 + $0x10] sm:$0xff]
        %v885 = vld [vmem:[%s881 + $0x18] sm:$0xff]
        %s886 = scalar_lea.vmem %s7, 1
        %v887 = vld [vmem:[%s886] sm:$0x1]
        %v889 = vlaneseq
        %v890 = vshrl.u32 %v889, 7
        %v891 = vsub.s32 0, %v890
        %v892 = vrot.slane %v887, %v891
        %894 = vmatprep.subr.mxu0 0.0
        %895 = vmatpush1.msra.mxu0 0.0
        %896 = vmatprep.subr.mxu0 0.0
        %897 = vmatpush1.msra.mxu0 0.0
        %898 = vmatprep.subr.mxu0 0.0
        %899 = vmatpush1.msra.mxu0 0.0
        %900 = vmatprep.subr.mxu0 0.0
        %901 = vmatpush1.msra.mxu0 0.0
        %902 = vmatprep.subr.mxu0 0.0
        %903 = vmatpush1.msra.mxu0 0.0
        %904 = vmatprep.subr.mxu0 0.0
        %905 = vmatpush1.msra.mxu0 0.0
        %906 = vmatprep.subr.mxu0 0.0
        %907 = vmatpush1.msra.mxu0 0.0
        %908 = vmatprep.subr.mxu0 0.0
        %909 = vmatpush1.msra.mxu0 0.0
        %910 = vmatprep.subr.mxu0 0.0
        %911 = vmatpush1.msra.mxu0 0.0
        %912 = vmatprep.subr.mxu0 0.0
        %913 = vmatpush1.msra.mxu0 0.0
        %914 = vmatprep.subr.mxu0 0.0
        %915 = vmatpush1.msra.mxu0 0.0
        %916 = vmatprep.subr.mxu0 0.0
        %917 = vmatpush1.msra.mxu0 0.0
        %918 = vmatprep.subr.mxu0 0.0
        %919 = vmatpush1.msra.mxu0 %v885
        %920 = vmatprep.subr.mxu0 0.0
        %921 = vmatpush1.msra.mxu0 %v884
        %922 = vmatprep.subr.mxu0 0.0
        %923 = vmatpush1.msra.mxu0 %v883
        %924 = vmatprep.subr.mxu0 0.0
        %925 = vmatpush1.msra.mxu0 %v882
        %926 = vmatprep.subr.mxu0 0.0
        %927 = vmatpush2.msra.mxu0 0.0
        %928 = vmatprep.subr.mxu0 0.0
        %929 = vmatpush2.msra.mxu0 0.0
        %930 = vmatprep.subr.mxu0 0.0
        %931 = vmatpush2.msra.mxu0 0.0
        %932 = vmatprep.subr.mxu0 0.0
        %933 = vmatpush2.msra.mxu0 0.0
        %934 = vmatprep.subr.mxu0 0.0
        %935 = vmatpush2.msra.mxu0 0.0
        %936 = vmatprep.subr.mxu0 0.0
        %937 = vmatpush2.msra.mxu0 0.0
        %938 = vmatprep.subr.mxu0 0.0
        %939 = vmatpush2.msra.mxu0 0.0
        %940 = vmatprep.subr.mxu0 0.0
        %941 = vmatpush2.msra.mxu0 0.0
        %942 = vmatprep.subr.mxu0 0.0
        %943 = vmatpush2.msra.mxu0 0.0
        %944 = vmatprep.subr.mxu0 0.0
        %945 = vmatpush2.msra.mxu0 0.0
        %946 = vmatprep.subr.mxu0 0.0
        %947 = vmatpush2.msra.mxu0 0.0
        %948 = vmatprep.subr.mxu0 0.0
        %949 = vmatpush2.msra.mxu0 0.0
        %950 = vmatprep.subr.mxu0 0.0
        %951 = vmatpush2.msra.mxu0 0.0
        %952 = vmatprep.subr.mxu0 0.0
        %953 = vmatpush2.msra.mxu0 0.0
        %954 = vmatprep.subr.mxu0 0.0
        %955 = vmatpush2.msra.mxu0 0.0
        %956 = vmatprep.subr.mxu0 0.0
        %957 = vmatpush2.msra.mxu0 0.0
        %958 = vmatprep.mubr.f32.mxu0 0.0
        %959 = vmatmul.mubr.f32.gmra.mxu0 %v607
        %v960 = vpop.f32.mrf.mxu0
        %v961 = vadd.f32 %v892, %v960
        %v962 = vpop.f32.mrf.mxu0
        %963 = vmatprep.mubr.f32.mxu0 0.0
        %964 = vmatmul.mubr.f32.gmra.mxu0 %v610
        %v965 = vpop.f32.mrf.mxu0
        %v966 = vadd.f32 %v892, %v965
        %v967 = vpop.f32.mrf.mxu0
        %968 = vdwg.mxu0
        %v969 = vmul.f32 %v879, %v961
        %v970 = vmul.f32 %v880, %v966
        %973 = vrot.lane.b32.xlu0 %v961, 96
        %v974 = vpop.permute.xlu0 %973
        %975 = vrot.lane.b32.xlu0 %v966, 96
        %v976 = vpop.permute.xlu0 %975
        %v979 = vadd.f32 %v969, %v974
        %v980 = vadd.f32 %v970, %v976
        %v981 = vmul.f32 %v979, %v702
        %v982 = vmul.f32 %v980, %v707
        %v985 = vrot.slane %v981, 7
        %v986 = vrot.slane %v982, 7
        %v987 = vsel %vm422, %v985, %v986
        %v991 = vsel %vm422, 0.0, %v985
        %v992 = vsel %vm422, %v986, 0.0
        %v995 = vrot.slane %v991, 1
        %v996 = vrot.slane %v987, 1
        %v997 = vsel %vm433, %v995, %v996
        %v998 = vrot.slane %v992, 1
        %v999 = vsel %vm433, %v996, %v998
        %1000 = vrot.lane.b32.xlu0 %v997, 32
        %v1001 = vpop.permute.xlu0 %1000
        %1002 = vrot.lane.b32.xlu0 %v999, 32
        %v1003 = vpop.permute.xlu0 %1002
        %v1006 = vrot.slane %v991, 2
        %v1007 = vrot.slane %v987, 2
        %v1008 = vsel %vm445, %v1006, %v1007
        %v1009 = vrot.slane %v992, 2
        %v1010 = vsel %vm445, %v1007, %v1009
        %1011 = vrot.lane.b32.xlu0 %v1008, 64
        %v1012 = vpop.permute.xlu0 %1011
        %1013 = vrot.lane.b32.xlu0 %v1010, 64
        %v1014 = vpop.permute.xlu0 %1013
        %v1017 = vsel %vm457, %v991, %v1001
        %v1018 = vsel %vm457, %v987, %v1003
        %v1019 = vsel %vm460, %v1017, %v1012
        %v1020 = vsel %vm460, %v1018, %v1014
        %s1021 = scalar_lea.vmem %s4, 192
        %v1022 = vld [vmem:[%s1021] sm:$0xff]
        %v1023 = vld [vmem:[%s1021 + $0x8] sm:$0xff]
        %v1024 = vld [vmem:[%s1021 + $0x10] sm:$0xff]
        %v1025 = vld [vmem:[%s1021 + $0x18] sm:$0xff]
        %v1026 = vld [vmem:[%s1021 + $0x20] sm:$0xff]
        %v1027 = vld [vmem:[%s1021 + $0x28] sm:$0xff]
        %v1028 = vld [vmem:[%s1021 + $0x30] sm:$0xff]
        %v1029 = vld [vmem:[%s1021 + $0x38] sm:$0xff]
        %v1030 = vld [vmem:[%s1021 + $0x40] sm:$0xff]
        %v1031 = vld [vmem:[%s1021 + $0x48] sm:$0xff]
        %v1032 = vld [vmem:[%s1021 + $0x50] sm:$0xff]
        %v1033 = vld [vmem:[%s1021 + $0x58] sm:$0xff]
        %s1034 = scalar_lea.vmem %s5, 2
        %v1035 = vld [vmem:[%s1034] sm:$0x1]
        %v1037 = vlaneseq
        %v1038 = vshrl.u32 %v1037, 7
        %v1039 = vsub.s32 0, %v1038
        %v1040 = vrot.slane %v1035, %v1039
        %v1043 = vsel %vm482, %v1019, 0
        %v1046 = vsel %vm482, %v1020, 0
        %1048 = vmatprep.subr.mxu0 0.0
        %1049 = vmatpush1.msra.mxu0 0.0
        %1050 = vmatprep.subr.mxu0 0.0
        %1051 = vmatpush1.msra.mxu0 0.0
        %1052 = vmatprep.subr.mxu0 0.0
        %1053 = vmatpush1.msra.mxu0 0.0
        %1054 = vmatprep.subr.mxu0 0.0
        %1055 = vmatpush1.msra.mxu0 0.0
        %1056 = vmatprep.subr.mxu0 0.0
        %1057 = vmatpush1.msra.mxu0 %v1033
        %1058 = vmatprep.subr.mxu0 0.0
        %1059 = vmatpush1.msra.mxu0 %v1032
        %1060 = vmatprep.subr.mxu0 0.0
        %1061 = vmatpush1.msra.mxu0 %v1031
        %1062 = vmatprep.subr.mxu0 0.0
        %1063 = vmatpush1.msra.mxu0 %v1030
        %1064 = vmatprep.subr.mxu0 0.0
        %1065 = vmatpush1.msra.mxu0 %v1029
        %1066 = vmatprep.subr.mxu0 0.0
        %1067 = vmatpush1.msra.mxu0 %v1028
        %1068 = vmatprep.subr.mxu0 0.0
        %1069 = vmatpush1.msra.mxu0 %v1027
        %1070 = vmatprep.subr.mxu0 0.0
        %1071 = vmatpush1.msra.mxu0 %v1026
        %1072 = vmatprep.subr.mxu0 0.0
        %1073 = vmatpush1.msra.mxu0 %v1025
        %1074 = vmatprep.subr.mxu0 0.0
        %1075 = vmatpush1.msra.mxu0 %v1024
        %1076 = vmatprep.subr.mxu0 0.0
        %1077 = vmatpush1.msra.mxu0 %v1023
        %1078 = vmatprep.subr.mxu0 0.0
        %1079 = vmatpush1.msra.mxu0 %v1022
        %1080 = vmatprep.subr.mxu0 0.0
        %1081 = vmatpush2.msra.mxu0 0.0
        %1082 = vmatprep.subr.mxu0 0.0
        %1083 = vmatpush2.msra.mxu0 0.0
        %1084 = vmatprep.subr.mxu0 0.0
        %1085 = vmatpush2.msra.mxu0 0.0
        %1086 = vmatprep.subr.mxu0 0.0
        %1087 = vmatpush2.msra.mxu0 0.0
        %1088 = vmatprep.subr.mxu0 0.0
        %1089 = vmatpush2.msra.mxu0 0.0
        %1090 = vmatprep.subr.mxu0 0.0
        %1091 = vmatpush2.msra.mxu0 0.0
        %1092 = vmatprep.subr.mxu0 0.0
        %1093 = vmatpush2.msra.mxu0 0.0
        %1094 = vmatprep.subr.mxu0 0.0
        %1095 = vmatpush2.msra.mxu0 0.0
        %1096 = vmatprep.subr.mxu0 0.0
        %1097 = vmatpush2.msra.mxu0 0.0
        %1098 = vmatprep.subr.mxu0 0.0
        %1099 = vmatpush2.msra.mxu0 0.0
        %1100 = vmatprep.subr.mxu0 0.0
        %1101 = vmatpush2.msra.mxu0 0.0
        %1102 = vmatprep.subr.mxu0 0.0
        %1103 = vmatpush2.msra.mxu0 0.0
        %1104 = vmatprep.subr.mxu0 0.0
        %1105 = vmatpush2.msra.mxu0 0.0
        %1106 = vmatprep.subr.mxu0 0.0
        %1107 = vmatpush2.msra.mxu0 0.0
        %1108 = vmatprep.subr.mxu0 0.0
        %1109 = vmatpush2.msra.mxu0 0.0
        %1110 = vmatprep.subr.mxu0 0.0
        %1111 = vmatpush2.msra.mxu0 0.0
        %1112 = vmatprep.mubr.f32.mxu0 0.0
        %1113 = vmatmul.mubr.f32.gmra.mxu0 %v1043
        %v1114 = vpop.f32.mrf.mxu0
        %v1115 = vadd.f32 %v1040, %v1114
        %v1116 = vpop.f32.mrf.mxu0
        %1117 = vmatprep.mubr.f32.mxu0 0.0
        %1118 = vmatmul.mubr.f32.gmra.mxu0 %v1046
        %v1119 = vpop.f32.mrf.mxu0
        %v1120 = vadd.f32 %v1040, %v1119
        %v1121 = vpop.f32.mrf.mxu0
        %1122 = vdwg.mxu0
        %v1123 = vmax.f32 %v1115, 0.0
        %v1124 = vmax.f32 %v1120, 0.0
        %v1125 = vsel %vm457, %v1123, 0.0
        %v1126 = vsel %vm457, %v1124, 0.0
        %v1127 = vadd.f32 %v1125, %v1126
        %v1128 = vrot.slane %v1127, 4
        %v1129 = vadd.f32 %v1127, %v1128
        %v1130 = vrot.slane %v1129, 2
        %v1131 = vadd.f32 %v1129, %v1130
        %v1132 = vrot.slane %v1131, 1
        %v1133 = vadd.f32 %v1131, %v1132
        %v1134 = vmul.f32 %v1133, %v575
        %v1135 = vsub.f32 %v1123, %v1134
        %v1136 = vsub.f32 %v1124, %v1134
        %v1137 = vmul.f32 %v1135, %v1135
        %v1138 = vmul.f32 %v1136, %v1136
        %v1139 = vsel %vm457, %v1137, 0.0
        %v1140 = vsel %vm457, %v1138, 0.0
        %v1141 = vadd.f32 %v1139, %v1140
        %v1142 = vrot.slane %v1141, 4
        %v1143 = vadd.f32 %v1141, %v1142
        %v1144 = vrot.slane %v1143, 2
        %v1145 = vadd.f32 %v1143, %v1144
        %v1146 = vrot.slane %v1145, 1
        %v1147 = vadd.f32 %v1145, %v1146
        %v1148 = vmul.f32 %v1147, %v575
        %v1149 = vadd.f32 %v1148, 1e-05
        %v1150 = vrsqrt.pop %v1149
        %v1151 = vmul.f32 %v1135, %v1150
        %v1152 = vmul.f32 %v1136, %v1150
        %s1153 = scalar_lea.vmem %s6, 64
        %v1154 = vld [vmem:[%s1153] sm:$0xff]
        %v1155 = vld [vmem:[%s1153 + $0x8] sm:$0xff]
        %v1156 = vld [vmem:[%s1153 + $0x10] sm:$0xff]
        %v1157 = vld [vmem:[%s1153 + $0x18] sm:$0xff]
        %s1158 = scalar_lea.vmem %s7, 2
        %v1159 = vld [vmem:[%s1158] sm:$0x1]
        %v1161 = vlaneseq
        %v1162 = vshrl.u32 %v1161, 7
        %v1163 = vsub.s32 0, %v1162
        %v1164 = vrot.slane %v1159, %v1163
        %1166 = vmatprep.subr.mxu0 0.0
        %1167 = vmatpush1.msra.mxu0 0.0
        %1168 = vmatprep.subr.mxu0 0.0
        %1169 = vmatpush1.msra.mxu0 0.0
        %1170 = vmatprep.subr.mxu0 0.0
        %1171 = vmatpush1.msra.mxu0 0.0
        %1172 = vmatprep.subr.mxu0 0.0
        %1173 = vmatpush1.msra.mxu0 0.0
        %1174 = vmatprep.subr.mxu0 0.0
        %1175 = vmatpush1.msra.mxu0 0.0
        %1176 = vmatprep.subr.mxu0 0.0
        %1177 = vmatpush1.msra.mxu0 0.0
        %1178 = vmatprep.subr.mxu0 0.0
        %1179 = vmatpush1.msra.mxu0 0.0
        %1180 = vmatprep.subr.mxu0 0.0
        %1181 = vmatpush1.msra.mxu0 0.0
        %1182 = vmatprep.subr.mxu0 0.0
        %1183 = vmatpush1.msra.mxu0 0.0
        %1184 = vmatprep.subr.mxu0 0.0
        %1185 = vmatpush1.msra.mxu0 0.0
        %1186 = vmatprep.subr.mxu0 0.0
        %1187 = vmatpush1.msra.mxu0 0.0
        %1188 = vmatprep.subr.mxu0 0.0
        %1189 = vmatpush1.msra.mxu0 0.0
        %1190 = vmatprep.subr.mxu0 0.0
        %1191 = vmatpush1.msra.mxu0 %v1157
        %1192 = vmatprep.subr.mxu0 0.0
        %1193 = vmatpush1.msra.mxu0 %v1156
        %1194 = vmatprep.subr.mxu0 0.0
        %1195 = vmatpush1.msra.mxu0 %v1155
        %1196 = vmatprep.subr.mxu0 0.0
        %1197 = vmatpush1.msra.mxu0 %v1154
        %1198 = vmatprep.subr.mxu0 0.0
        %1199 = vmatpush2.msra.mxu0 0.0
        %1200 = vmatprep.subr.mxu0 0.0
        %1201 = vmatpush2.msra.mxu0 0.0
        %1202 = vmatprep.subr.mxu0 0.0
        %1203 = vmatpush2.msra.mxu0 0.0
        %1204 = vmatprep.subr.mxu0 0.0
        %1205 = vmatpush2.msra.mxu0 0.0
        %1206 = vmatprep.subr.mxu0 0.0
        %1207 = vmatpush2.msra.mxu0 0.0
        %1208 = vmatprep.subr.mxu0 0.0
        %1209 = vmatpush2.msra.mxu0 0.0
        %1210 = vmatprep.subr.mxu0 0.0
        %1211 = vmatpush2.msra.mxu0 0.0
        %1212 = vmatprep.subr.mxu0 0.0
        %1213 = vmatpush2.msra.mxu0 0.0
        %1214 = vmatprep.subr.mxu0 0.0
        %1215 = vmatpush2.msra.mxu0 0.0
        %1216 = vmatprep.subr.mxu0 0.0
        %1217 = vmatpush2.msra.mxu0 0.0
        %1218 = vmatprep.subr.mxu0 0.0
        %1219 = vmatpush2.msra.mxu0 0.0
        %1220 = vmatprep.subr.mxu0 0.0
        %1221 = vmatpush2.msra.mxu0 0.0
        %1222 = vmatprep.subr.mxu0 0.0
        %1223 = vmatpush2.msra.mxu0 0.0
        %1224 = vmatprep.subr.mxu0 0.0
        %1225 = vmatpush2.msra.mxu0 0.0
        %1226 = vmatprep.subr.mxu0 0.0
        %1227 = vmatpush2.msra.mxu0 0.0
        %1228 = vmatprep.subr.mxu0 0.0
        %1229 = vmatpush2.msra.mxu0 0.0
        %1230 = vmatprep.mubr.f32.mxu0 0.0
        %1231 = vmatmul.mubr.f32.gmra.mxu0 %v607
        %v1232 = vpop.f32.mrf.mxu0
        %v1233 = vadd.f32 %v1164, %v1232
        %v1234 = vpop.f32.mrf.mxu0
        %1235 = vmatprep.mubr.f32.mxu0 0.0
        %1236 = vmatmul.mubr.f32.gmra.mxu0 %v610
        %v1237 = vpop.f32.mrf.mxu0
        %v1238 = vadd.f32 %v1164, %v1237
        %v1239 = vpop.f32.mrf.mxu0
        %1240 = vdwg.mxu0
        %v1241 = vmul.f32 %v1151, %v1233
        %v1242 = vmul.f32 %v1152, %v1238
        %1245 = vrot.lane.b32.xlu0 %v1233, 96
        %v1246 = vpop.permute.xlu0 %1245
        %1247 = vrot.lane.b32.xlu0 %v1238, 96
        %v1248 = vpop.permute.xlu0 %1247
        %v1251 = vadd.f32 %v1241, %v1246
        %v1252 = vadd.f32 %v1242, %v1248
        %v1253 = vmul.f32 %v1251, %v702
        %v1254 = vmul.f32 %v1252, %v707
        %v1257 = vrot.slane %v1253, 7
        %v1258 = vrot.slane %v1254, 7
        %v1259 = vsel %vm422, %v1257, %v1258
        %v1263 = vsel %vm422, 0.0, %v1257
        %v1264 = vsel %vm422, %v1258, 0.0
        %v1267 = vrot.slane %v1263, 1
        %v1268 = vrot.slane %v1259, 1
        %v1269 = vsel %vm433, %v1267, %v1268
        %v1270 = vrot.slane %v1264, 1
        %v1271 = vsel %vm433, %v1268, %v1270
        %1272 = vrot.lane.b32.xlu0 %v1269, 32
        %v1273 = vpop.permute.xlu0 %1272
        %1274 = vrot.lane.b32.xlu0 %v1271, 32
        %v1275 = vpop.permute.xlu0 %1274
        %v1278 = vrot.slane %v1263, 2
        %v1279 = vrot.slane %v1259, 2
        %v1280 = vsel %vm445, %v1278, %v1279
        %v1281 = vrot.slane %v1264, 2
        %v1282 = vsel %vm445, %v1279, %v1281
        %1283 = vrot.lane.b32.xlu0 %v1280, 64
        %v1284 = vpop.permute.xlu0 %1283
        %1285 = vrot.lane.b32.xlu0 %v1282, 64
        %v1286 = vpop.permute.xlu0 %1285
        %v1289 = vsel %vm457, %v1263, %v1273
        %v1290 = vsel %vm457, %v1259, %v1275
        %v1291 = vsel %vm460, %v1289, %v1284
        %v1292 = vsel %vm460, %v1290, %v1286
        %s1293 = scalar_lea.vmem %s4, 288
        %v1294 = vld [vmem:[%s1293] sm:$0xff]
        %v1295 = vld [vmem:[%s1293 + $0x8] sm:$0xff]
        %v1296 = vld [vmem:[%s1293 + $0x10] sm:$0xff]
        %v1297 = vld [vmem:[%s1293 + $0x18] sm:$0xff]
        %v1298 = vld [vmem:[%s1293 + $0x20] sm:$0xff]
        %v1299 = vld [vmem:[%s1293 + $0x28] sm:$0xff]
        %v1300 = vld [vmem:[%s1293 + $0x30] sm:$0xff]
        %v1301 = vld [vmem:[%s1293 + $0x38] sm:$0xff]
        %v1302 = vld [vmem:[%s1293 + $0x40] sm:$0xff]
        %v1303 = vld [vmem:[%s1293 + $0x48] sm:$0xff]
        %v1304 = vld [vmem:[%s1293 + $0x50] sm:$0xff]
        %v1305 = vld [vmem:[%s1293 + $0x58] sm:$0xff]
        %s1306 = scalar_lea.vmem %s5, 3
        %v1307 = vld [vmem:[%s1306] sm:$0x1]
        %v1309 = vlaneseq
        %v1310 = vshrl.u32 %v1309, 7
        %v1311 = vsub.s32 0, %v1310
        %v1312 = vrot.slane %v1307, %v1311
        %v1315 = vsel %vm482, %v1291, 0
        %v1318 = vsel %vm482, %v1292, 0
        %1320 = vmatprep.subr.mxu0 0.0
        %1321 = vmatpush1.msra.mxu0 0.0
        %1322 = vmatprep.subr.mxu0 0.0
        %1323 = vmatpush1.msra.mxu0 0.0
        %1324 = vmatprep.subr.mxu0 0.0
        %1325 = vmatpush1.msra.mxu0 0.0
        %1326 = vmatprep.subr.mxu0 0.0
        %1327 = vmatpush1.msra.mxu0 0.0
        %1328 = vmatprep.subr.mxu0 0.0
        %1329 = vmatpush1.msra.mxu0 %v1305
        %1330 = vmatprep.subr.mxu0 0.0
        %1331 = vmatpush1.msra.mxu0 %v1304
        %1332 = vmatprep.subr.mxu0 0.0
        %1333 = vmatpush1.msra.mxu0 %v1303
        %1334 = vmatprep.subr.mxu0 0.0
        %1335 = vmatpush1.msra.mxu0 %v1302
        %1336 = vmatprep.subr.mxu0 0.0
        %1337 = vmatpush1.msra.mxu0 %v1301
        %1338 = vmatprep.subr.mxu0 0.0
        %1339 = vmatpush1.msra.mxu0 %v1300
        %1340 = vmatprep.subr.mxu0 0.0
        %1341 = vmatpush1.msra.mxu0 %v1299
        %1342 = vmatprep.subr.mxu0 0.0
        %1343 = vmatpush1.msra.mxu0 %v1298
        %1344 = vmatprep.subr.mxu0 0.0
        %1345 = vmatpush1.msra.mxu0 %v1297
        %1346 = vmatprep.subr.mxu0 0.0
        %1347 = vmatpush1.msra.mxu0 %v1296
        %1348 = vmatprep.subr.mxu0 0.0
        %1349 = vmatpush1.msra.mxu0 %v1295
        %1350 = vmatprep.subr.mxu0 0.0
        %1351 = vmatpush1.msra.mxu0 %v1294
        %1352 = vmatprep.subr.mxu0 0.0
        %1353 = vmatpush2.msra.mxu0 0.0
        %1354 = vmatprep.subr.mxu0 0.0
        %1355 = vmatpush2.msra.mxu0 0.0
        %1356 = vmatprep.subr.mxu0 0.0
        %1357 = vmatpush2.msra.mxu0 0.0
        %1358 = vmatprep.subr.mxu0 0.0
        %1359 = vmatpush2.msra.mxu0 0.0
        %1360 = vmatprep.subr.mxu0 0.0
        %1361 = vmatpush2.msra.mxu0 0.0
        %1362 = vmatprep.subr.mxu0 0.0
        %1363 = vmatpush2.msra.mxu0 0.0
        %1364 = vmatprep.subr.mxu0 0.0
        %1365 = vmatpush2.msra.mxu0 0.0
        %1366 = vmatprep.subr.mxu0 0.0
        %1367 = vmatpush2.msra.mxu0 0.0
        %1368 = vmatprep.subr.mxu0 0.0
        %1369 = vmatpush2.msra.mxu0 0.0
        %1370 = vmatprep.subr.mxu0 0.0
        %1371 = vmatpush2.msra.mxu0 0.0
        %1372 = vmatprep.subr.mxu0 0.0
        %1373 = vmatpush2.msra.mxu0 0.0
        %1374 = vmatprep.subr.mxu0 0.0
        %1375 = vmatpush2.msra.mxu0 0.0
        %1376 = vmatprep.subr.mxu0 0.0
        %1377 = vmatpush2.msra.mxu0 0.0
        %1378 = vmatprep.subr.mxu0 0.0
        %1379 = vmatpush2.msra.mxu0 0.0
        %1380 = vmatprep.subr.mxu0 0.0
        %1381 = vmatpush2.msra.mxu0 0.0
        %1382 = vmatprep.subr.mxu0 0.0
        %1383 = vmatpush2.msra.mxu0 0.0
        %1384 = vmatprep.mubr.f32.mxu0 0.0
        %1385 = vmatmul.mubr.f32.gmra.mxu0 %v1315
        %v1386 = vpop.f32.mrf.mxu0
        %v1387 = vadd.f32 %v1312, %v1386
        %v1388 = vpop.f32.mrf.mxu0
        %1389 = vmatprep.mubr.f32.mxu0 0.0
        %1390 = vmatmul.mubr.f32.gmra.mxu0 %v1318
        %v1391 = vpop.f32.mrf.mxu0
        %v1392 = vadd.f32 %v1312, %v1391
        %v1393 = vpop.f32.mrf.mxu0
        %1394 = vdwg.mxu0
        %v1395 = vmax.f32 %v1387, 0.0
        %v1396 = vmax.f32 %v1392, 0.0
        %v1397 = vsel %vm457, %v1395, 0.0
        %v1398 = vsel %vm457, %v1396, 0.0
        %v1399 = vadd.f32 %v1397, %v1398
        %v1400 = vrot.slane %v1399, 4
        %v1401 = vadd.f32 %v1399, %v1400
        %v1402 = vrot.slane %v1401, 2
        %v1403 = vadd.f32 %v1401, %v1402
        %v1404 = vrot.slane %v1403, 1
        %v1405 = vadd.f32 %v1403, %v1404
        %v1406 = vmul.f32 %v1405, %v575
        %v1407 = vsub.f32 %v1395, %v1406
        %v1408 = vsub.f32 %v1396, %v1406
        %v1409 = vmul.f32 %v1407, %v1407
        %v1410 = vmul.f32 %v1408, %v1408
        %v1411 = vsel %vm457, %v1409, 0.0
        %v1412 = vsel %vm457, %v1410, 0.0
        %v1413 = vadd.f32 %v1411, %v1412
        %v1414 = vrot.slane %v1413, 4
        %v1415 = vadd.f32 %v1413, %v1414
        %v1416 = vrot.slane %v1415, 2
        %v1417 = vadd.f32 %v1415, %v1416
        %v1418 = vrot.slane %v1417, 1
        %v1419 = vadd.f32 %v1417, %v1418
        %v1420 = vmul.f32 %v1419, %v575
        %v1421 = vadd.f32 %v1420, 1e-05
        %v1422 = vrsqrt.pop %v1421
        %v1423 = vmul.f32 %v1407, %v1422
        %v1424 = vmul.f32 %v1408, %v1422
        %s1425 = scalar_lea.vmem %s6, 96
        %v1426 = vld [vmem:[%s1425] sm:$0xff]
        %v1427 = vld [vmem:[%s1425 + $0x8] sm:$0xff]
        %v1428 = vld [vmem:[%s1425 + $0x10] sm:$0xff]
        %v1429 = vld [vmem:[%s1425 + $0x18] sm:$0xff]
        %s1430 = scalar_lea.vmem %s7, 3
        %v1431 = vld [vmem:[%s1430] sm:$0x1]
        %v1433 = vlaneseq
        %v1434 = vshrl.u32 %v1433, 7
        %v1435 = vsub.s32 0, %v1434
        %v1436 = vrot.slane %v1431, %v1435
        %1438 = vmatprep.subr.mxu0 0.0
        %1439 = vmatpush1.msra.mxu0 0.0
        %1440 = vmatprep.subr.mxu0 0.0
        %1441 = vmatpush1.msra.mxu0 0.0
        %1442 = vmatprep.subr.mxu0 0.0
        %1443 = vmatpush1.msra.mxu0 0.0
        %1444 = vmatprep.subr.mxu0 0.0
        %1445 = vmatpush1.msra.mxu0 0.0
        %1446 = vmatprep.subr.mxu0 0.0
        %1447 = vmatpush1.msra.mxu0 0.0
        %1448 = vmatprep.subr.mxu0 0.0
        %1449 = vmatpush1.msra.mxu0 0.0
        %1450 = vmatprep.subr.mxu0 0.0
        %1451 = vmatpush1.msra.mxu0 0.0
        %1452 = vmatprep.subr.mxu0 0.0
        %1453 = vmatpush1.msra.mxu0 0.0
        %1454 = vmatprep.subr.mxu0 0.0
        %1455 = vmatpush1.msra.mxu0 0.0
        %1456 = vmatprep.subr.mxu0 0.0
        %1457 = vmatpush1.msra.mxu0 0.0
        %1458 = vmatprep.subr.mxu0 0.0
        %1459 = vmatpush1.msra.mxu0 0.0
        %1460 = vmatprep.subr.mxu0 0.0
        %1461 = vmatpush1.msra.mxu0 0.0
        %1462 = vmatprep.subr.mxu0 0.0
        %1463 = vmatpush1.msra.mxu0 %v1429
        %1464 = vmatprep.subr.mxu0 0.0
        %1465 = vmatpush1.msra.mxu0 %v1428
        %1466 = vmatprep.subr.mxu0 0.0
        %1467 = vmatpush1.msra.mxu0 %v1427
        %1468 = vmatprep.subr.mxu0 0.0
        %1469 = vmatpush1.msra.mxu0 %v1426
        %1470 = vmatprep.subr.mxu0 0.0
        %1471 = vmatpush2.msra.mxu0 0.0
        %1472 = vmatprep.subr.mxu0 0.0
        %1473 = vmatpush2.msra.mxu0 0.0
        %1474 = vmatprep.subr.mxu0 0.0
        %1475 = vmatpush2.msra.mxu0 0.0
        %1476 = vmatprep.subr.mxu0 0.0
        %1477 = vmatpush2.msra.mxu0 0.0
        %1478 = vmatprep.subr.mxu0 0.0
        %1479 = vmatpush2.msra.mxu0 0.0
        %1480 = vmatprep.subr.mxu0 0.0
        %1481 = vmatpush2.msra.mxu0 0.0
        %1482 = vmatprep.subr.mxu0 0.0
        %1483 = vmatpush2.msra.mxu0 0.0
        %1484 = vmatprep.subr.mxu0 0.0
        %1485 = vmatpush2.msra.mxu0 0.0
        %1486 = vmatprep.subr.mxu0 0.0
        %1487 = vmatpush2.msra.mxu0 0.0
        %1488 = vmatprep.subr.mxu0 0.0
        %1489 = vmatpush2.msra.mxu0 0.0
        %1490 = vmatprep.subr.mxu0 0.0
        %1491 = vmatpush2.msra.mxu0 0.0
        %1492 = vmatprep.subr.mxu0 0.0
        %1493 = vmatpush2.msra.mxu0 0.0
        %1494 = vmatprep.subr.mxu0 0.0
        %1495 = vmatpush2.msra.mxu0 0.0
        %1496 = vmatprep.subr.mxu0 0.0
        %1497 = vmatpush2.msra.mxu0 0.0
        %1498 = vmatprep.subr.mxu0 0.0
        %1499 = vmatpush2.msra.mxu0 0.0
        %1500 = vmatprep.subr.mxu0 0.0
        %1501 = vmatpush2.msra.mxu0 0.0
        %1502 = vmatprep.mubr.f32.mxu0 0.0
        %1503 = vmatmul.mubr.f32.gmra.mxu0 %v607
        %v1504 = vpop.f32.mrf.mxu0
        %v1505 = vadd.f32 %v1436, %v1504
        %v1506 = vpop.f32.mrf.mxu0
        %1507 = vmatprep.mubr.f32.mxu0 0.0
        %1508 = vmatmul.mubr.f32.gmra.mxu0 %v610
        %v1509 = vpop.f32.mrf.mxu0
        %v1510 = vadd.f32 %v1436, %v1509
        %v1511 = vpop.f32.mrf.mxu0
        %1512 = vdwg.mxu0
        %v1513 = vmul.f32 %v1423, %v1505
        %v1514 = vmul.f32 %v1424, %v1510
        %1517 = vrot.lane.b32.xlu0 %v1505, 96
        %v1518 = vpop.permute.xlu0 %1517
        %1519 = vrot.lane.b32.xlu0 %v1510, 96
        %v1520 = vpop.permute.xlu0 %1519
        %v1523 = vadd.f32 %v1513, %v1518
        %v1524 = vadd.f32 %v1514, %v1520
        %v1525 = vmul.f32 %v1523, %v702
        %v1526 = vmul.f32 %v1524, %v707
        %v1529 = vrot.slane %v1525, 7
        %v1530 = vrot.slane %v1526, 7
        %v1531 = vsel %vm422, %v1529, %v1530
        %v1535 = vsel %vm422, 0.0, %v1529
        %v1536 = vsel %vm422, %v1530, 0.0
        %v1539 = vrot.slane %v1535, 1
        %v1540 = vrot.slane %v1531, 1
        %v1541 = vsel %vm433, %v1539, %v1540
        %v1542 = vrot.slane %v1536, 1
        %v1543 = vsel %vm433, %v1540, %v1542
        %1544 = vrot.lane.b32.xlu0 %v1541, 32
        %v1545 = vpop.permute.xlu0 %1544
        %1546 = vrot.lane.b32.xlu0 %v1543, 32
        %v1547 = vpop.permute.xlu0 %1546
        %v1550 = vrot.slane %v1535, 2
        %v1551 = vrot.slane %v1531, 2
        %v1552 = vsel %vm445, %v1550, %v1551
        %v1553 = vrot.slane %v1536, 2
        %v1554 = vsel %vm445, %v1551, %v1553
        %1555 = vrot.lane.b32.xlu0 %v1552, 64
        %v1556 = vpop.permute.xlu0 %1555
        %1557 = vrot.lane.b32.xlu0 %v1554, 64
        %v1558 = vpop.permute.xlu0 %1557
        %v1561 = vsel %vm457, %v1535, %v1545
        %v1562 = vsel %vm457, %v1531, %v1547
        %v1563 = vsel %vm460, %v1561, %v1556
        %v1564 = vsel %vm460, %v1562, %v1558
        %s1565 = scalar_lea.vmem %s4, 384
        %v1566 = vld [vmem:[%s1565] sm:$0xff]
        %v1567 = vld [vmem:[%s1565 + $0x8] sm:$0xff]
        %v1568 = vld [vmem:[%s1565 + $0x10] sm:$0xff]
        %v1569 = vld [vmem:[%s1565 + $0x18] sm:$0xff]
        %v1570 = vld [vmem:[%s1565 + $0x20] sm:$0xff]
        %v1571 = vld [vmem:[%s1565 + $0x28] sm:$0xff]
        %v1572 = vld [vmem:[%s1565 + $0x30] sm:$0xff]
        %v1573 = vld [vmem:[%s1565 + $0x38] sm:$0xff]
        %v1574 = vld [vmem:[%s1565 + $0x40] sm:$0xff]
        %v1575 = vld [vmem:[%s1565 + $0x48] sm:$0xff]
        %v1576 = vld [vmem:[%s1565 + $0x50] sm:$0xff]
        %v1577 = vld [vmem:[%s1565 + $0x58] sm:$0xff]
        %s1578 = scalar_lea.vmem %s5, 4
        %v1579 = vld [vmem:[%s1578] sm:$0x1]
        %v1581 = vlaneseq
        %v1582 = vshrl.u32 %v1581, 7
        %v1583 = vsub.s32 0, %v1582
        %v1584 = vrot.slane %v1579, %v1583
        %v1587 = vsel %vm482, %v1563, 0
        %v1590 = vsel %vm482, %v1564, 0
        %1592 = vmatprep.subr.mxu0 0.0
        %1593 = vmatpush1.msra.mxu0 0.0
        %1594 = vmatprep.subr.mxu0 0.0
        %1595 = vmatpush1.msra.mxu0 0.0
        %1596 = vmatprep.subr.mxu0 0.0
        %1597 = vmatpush1.msra.mxu0 0.0
        %1598 = vmatprep.subr.mxu0 0.0
        %1599 = vmatpush1.msra.mxu0 0.0
        %1600 = vmatprep.subr.mxu0 0.0
        %1601 = vmatpush1.msra.mxu0 %v1577
        %1602 = vmatprep.subr.mxu0 0.0
        %1603 = vmatpush1.msra.mxu0 %v1576
        %1604 = vmatprep.subr.mxu0 0.0
        %1605 = vmatpush1.msra.mxu0 %v1575
        %1606 = vmatprep.subr.mxu0 0.0
        %1607 = vmatpush1.msra.mxu0 %v1574
        %1608 = vmatprep.subr.mxu0 0.0
        %1609 = vmatpush1.msra.mxu0 %v1573
        %1610 = vmatprep.subr.mxu0 0.0
        %1611 = vmatpush1.msra.mxu0 %v1572
        %1612 = vmatprep.subr.mxu0 0.0
        %1613 = vmatpush1.msra.mxu0 %v1571
        %1614 = vmatprep.subr.mxu0 0.0
        %1615 = vmatpush1.msra.mxu0 %v1570
        %1616 = vmatprep.subr.mxu0 0.0
        %1617 = vmatpush1.msra.mxu0 %v1569
        %1618 = vmatprep.subr.mxu0 0.0
        %1619 = vmatpush1.msra.mxu0 %v1568
        %1620 = vmatprep.subr.mxu0 0.0
        %1621 = vmatpush1.msra.mxu0 %v1567
        %1622 = vmatprep.subr.mxu0 0.0
        %1623 = vmatpush1.msra.mxu0 %v1566
        %1624 = vmatprep.subr.mxu0 0.0
        %1625 = vmatpush2.msra.mxu0 0.0
        %1626 = vmatprep.subr.mxu0 0.0
        %1627 = vmatpush2.msra.mxu0 0.0
        %1628 = vmatprep.subr.mxu0 0.0
        %1629 = vmatpush2.msra.mxu0 0.0
        %1630 = vmatprep.subr.mxu0 0.0
        %1631 = vmatpush2.msra.mxu0 0.0
        %1632 = vmatprep.subr.mxu0 0.0
        %1633 = vmatpush2.msra.mxu0 0.0
        %1634 = vmatprep.subr.mxu0 0.0
        %1635 = vmatpush2.msra.mxu0 0.0
        %1636 = vmatprep.subr.mxu0 0.0
        %1637 = vmatpush2.msra.mxu0 0.0
        %1638 = vmatprep.subr.mxu0 0.0
        %1639 = vmatpush2.msra.mxu0 0.0
        %1640 = vmatprep.subr.mxu0 0.0
        %1641 = vmatpush2.msra.mxu0 0.0
        %1642 = vmatprep.subr.mxu0 0.0
        %1643 = vmatpush2.msra.mxu0 0.0
        %1644 = vmatprep.subr.mxu0 0.0
        %1645 = vmatpush2.msra.mxu0 0.0
        %1646 = vmatprep.subr.mxu0 0.0
        %1647 = vmatpush2.msra.mxu0 0.0
        %1648 = vmatprep.subr.mxu0 0.0
        %1649 = vmatpush2.msra.mxu0 0.0
        %1650 = vmatprep.subr.mxu0 0.0
        %1651 = vmatpush2.msra.mxu0 0.0
        %1652 = vmatprep.subr.mxu0 0.0
        %1653 = vmatpush2.msra.mxu0 0.0
        %1654 = vmatprep.subr.mxu0 0.0
        %1655 = vmatpush2.msra.mxu0 0.0
        %1656 = vmatprep.mubr.f32.mxu0 0.0
        %1657 = vmatmul.mubr.f32.gmra.mxu0 %v1587
        %v1658 = vpop.f32.mrf.mxu0
        %v1659 = vadd.f32 %v1584, %v1658
        %v1660 = vpop.f32.mrf.mxu0
        %1661 = vmatprep.mubr.f32.mxu0 0.0
        %1662 = vmatmul.mubr.f32.gmra.mxu0 %v1590
        %v1663 = vpop.f32.mrf.mxu0
        %v1664 = vadd.f32 %v1584, %v1663
        %v1665 = vpop.f32.mrf.mxu0
        %1666 = vdwg.mxu0
        %v1667 = vmax.f32 %v1659, 0.0
        %v1668 = vmax.f32 %v1664, 0.0
        %v1669 = vsel %vm457, %v1667, 0.0
        %v1670 = vsel %vm457, %v1668, 0.0
        %v1671 = vadd.f32 %v1669, %v1670
        %v1672 = vrot.slane %v1671, 4
        %v1673 = vadd.f32 %v1671, %v1672
        %v1674 = vrot.slane %v1673, 2
        %v1675 = vadd.f32 %v1673, %v1674
        %v1676 = vrot.slane %v1675, 1
        %v1677 = vadd.f32 %v1675, %v1676
        %v1678 = vmul.f32 %v1677, %v575
        %v1679 = vsub.f32 %v1667, %v1678
        %v1680 = vsub.f32 %v1668, %v1678
        %v1681 = vmul.f32 %v1679, %v1679
        %v1682 = vmul.f32 %v1680, %v1680
        %v1683 = vsel %vm457, %v1681, 0.0
        %v1684 = vsel %vm457, %v1682, 0.0
        %v1685 = vadd.f32 %v1683, %v1684
        %v1686 = vrot.slane %v1685, 4
        %v1687 = vadd.f32 %v1685, %v1686
        %v1688 = vrot.slane %v1687, 2
        %v1689 = vadd.f32 %v1687, %v1688
        %v1690 = vrot.slane %v1689, 1
        %v1691 = vadd.f32 %v1689, %v1690
        %v1692 = vmul.f32 %v1691, %v575
        %v1693 = vadd.f32 %v1692, 1e-05
        %v1694 = vrsqrt.pop %v1693
        %v1695 = vmul.f32 %v1679, %v1694
        %v1696 = vmul.f32 %v1680, %v1694
        %s1697 = scalar_lea.vmem %s6, 128
        %v1698 = vld [vmem:[%s1697] sm:$0xff]
        %v1699 = vld [vmem:[%s1697 + $0x8] sm:$0xff]
        %v1700 = vld [vmem:[%s1697 + $0x10] sm:$0xff]
        %v1701 = vld [vmem:[%s1697 + $0x18] sm:$0xff]
        %s1702 = scalar_lea.vmem %s7, 4
        %v1703 = vld [vmem:[%s1702] sm:$0x1]
        %v1705 = vlaneseq
        %v1706 = vshrl.u32 %v1705, 7
        %v1707 = vsub.s32 0, %v1706
        %v1708 = vrot.slane %v1703, %v1707
        %1710 = vmatprep.subr.mxu0 0.0
        %1711 = vmatpush1.msra.mxu0 0.0
        %1712 = vmatprep.subr.mxu0 0.0
        %1713 = vmatpush1.msra.mxu0 0.0
        %1714 = vmatprep.subr.mxu0 0.0
        %1715 = vmatpush1.msra.mxu0 0.0
        %1716 = vmatprep.subr.mxu0 0.0
        %1717 = vmatpush1.msra.mxu0 0.0
        %1718 = vmatprep.subr.mxu0 0.0
        %1719 = vmatpush1.msra.mxu0 0.0
        %1720 = vmatprep.subr.mxu0 0.0
        %1721 = vmatpush1.msra.mxu0 0.0
        %1722 = vmatprep.subr.mxu0 0.0
        %1723 = vmatpush1.msra.mxu0 0.0
        %1724 = vmatprep.subr.mxu0 0.0
        %1725 = vmatpush1.msra.mxu0 0.0
        %1726 = vmatprep.subr.mxu0 0.0
        %1727 = vmatpush1.msra.mxu0 0.0
        %1728 = vmatprep.subr.mxu0 0.0
        %1729 = vmatpush1.msra.mxu0 0.0
        %1730 = vmatprep.subr.mxu0 0.0
        %1731 = vmatpush1.msra.mxu0 0.0
        %1732 = vmatprep.subr.mxu0 0.0
        %1733 = vmatpush1.msra.mxu0 0.0
        %1734 = vmatprep.subr.mxu0 0.0
        %1735 = vmatpush1.msra.mxu0 %v1701
        %1736 = vmatprep.subr.mxu0 0.0
        %1737 = vmatpush1.msra.mxu0 %v1700
        %1738 = vmatprep.subr.mxu0 0.0
        %1739 = vmatpush1.msra.mxu0 %v1699
        %1740 = vmatprep.subr.mxu0 0.0
        %1741 = vmatpush1.msra.mxu0 %v1698
        %1742 = vmatprep.subr.mxu0 0.0
        %1743 = vmatpush2.msra.mxu0 0.0
        %1744 = vmatprep.subr.mxu0 0.0
        %1745 = vmatpush2.msra.mxu0 0.0
        %1746 = vmatprep.subr.mxu0 0.0
        %1747 = vmatpush2.msra.mxu0 0.0
        %1748 = vmatprep.subr.mxu0 0.0
        %1749 = vmatpush2.msra.mxu0 0.0
        %1750 = vmatprep.subr.mxu0 0.0
        %1751 = vmatpush2.msra.mxu0 0.0
        %1752 = vmatprep.subr.mxu0 0.0
        %1753 = vmatpush2.msra.mxu0 0.0
        %1754 = vmatprep.subr.mxu0 0.0
        %1755 = vmatpush2.msra.mxu0 0.0
        %1756 = vmatprep.subr.mxu0 0.0
        %1757 = vmatpush2.msra.mxu0 0.0
        %1758 = vmatprep.subr.mxu0 0.0
        %1759 = vmatpush2.msra.mxu0 0.0
        %1760 = vmatprep.subr.mxu0 0.0
        %1761 = vmatpush2.msra.mxu0 0.0
        %1762 = vmatprep.subr.mxu0 0.0
        %1763 = vmatpush2.msra.mxu0 0.0
        %1764 = vmatprep.subr.mxu0 0.0
        %1765 = vmatpush2.msra.mxu0 0.0
        %1766 = vmatprep.subr.mxu0 0.0
        %1767 = vmatpush2.msra.mxu0 0.0
        %1768 = vmatprep.subr.mxu0 0.0
        %1769 = vmatpush2.msra.mxu0 0.0
        %1770 = vmatprep.subr.mxu0 0.0
        %1771 = vmatpush2.msra.mxu0 0.0
        %1772 = vmatprep.subr.mxu0 0.0
        %1773 = vmatpush2.msra.mxu0 0.0
        %1774 = vmatprep.mubr.f32.mxu0 0.0
        %1775 = vmatmul.mubr.f32.gmra.mxu0 %v607
        %v1776 = vpop.f32.mrf.mxu0
        %v1777 = vadd.f32 %v1708, %v1776
        %v1778 = vpop.f32.mrf.mxu0
        %1779 = vmatprep.mubr.f32.mxu0 0.0
        %1780 = vmatmul.mubr.f32.gmra.mxu0 %v610
        %v1781 = vpop.f32.mrf.mxu0
        %v1782 = vadd.f32 %v1708, %v1781
        %v1783 = vpop.f32.mrf.mxu0
        %1784 = vdwg.mxu0
        %v1785 = vmul.f32 %v1695, %v1777
        %v1786 = vmul.f32 %v1696, %v1782
        %1789 = vrot.lane.b32.xlu0 %v1777, 96
        %v1790 = vpop.permute.xlu0 %1789
        %1791 = vrot.lane.b32.xlu0 %v1782, 96
        %v1792 = vpop.permute.xlu0 %1791
        %v1795 = vadd.f32 %v1785, %v1790
        %v1796 = vadd.f32 %v1786, %v1792
        %v1797 = vmul.f32 %v1795, %v702
        %v1798 = vmul.f32 %v1796, %v707
        %v1799 = vld [vmem:[%s8] sm:$0x1]
        %v1800 = vld [vmem:[#allocation2] sm:$0x1]
        %1802 = vset.pattern.permute.xlu0 0
        %1803 = vperm.xlu0 %1802, %v1800
        %v1804 = vpop.permute.xlu0 %1803
        %v1806 = vlaneseq
        %v1807 = vshrl.u32 %v1806, 7
        %v1808 = vsub.s32 0, %v1807
        %v1809 = vrot.slane %v1804, %v1808
        %v1811 = vsel %vm457, %v1799, 0
        %v1814 = vsel %vm457, %v1797, 0
        %v1817 = vsel %vm457, %v1798, 0
        %1819 = vmatprep.subr.mxu0 0.0
        %1820 = vmatpush1.xpose.msra.mxu0 0.0
        %1821 = vmatprep.subr.mxu0 0.0
        %1822 = vmatpush1.xpose.msra.mxu0 0.0
        %1823 = vmatprep.subr.mxu0 0.0
        %1824 = vmatpush1.xpose.msra.mxu0 0.0
        %1825 = vmatprep.subr.mxu0 0.0
        %1826 = vmatpush1.xpose.msra.mxu0 0.0
        %1827 = vmatprep.subr.mxu0 0.0
        %1828 = vmatpush1.xpose.msra.mxu0 0.0
        %1829 = vmatprep.subr.mxu0 0.0
        %1830 = vmatpush1.xpose.msra.mxu0 0.0
        %1831 = vmatprep.subr.mxu0 0.0
        %1832 = vmatpush1.xpose.msra.mxu0 0.0
        %1833 = vmatprep.subr.mxu0 0.0
        %1834 = vmatpush1.xpose.msra.mxu0 0.0
        %1835 = vmatprep.subr.mxu0 0.0
        %1836 = vmatpush1.xpose.msra.mxu0 0.0
        %1837 = vmatprep.subr.mxu0 0.0
        %1838 = vmatpush1.xpose.msra.mxu0 0.0
        %1839 = vmatprep.subr.mxu0 0.0
        %1840 = vmatpush1.xpose.msra.mxu0 0.0
        %1841 = vmatprep.subr.mxu0 0.0
        %1842 = vmatpush1.xpose.msra.mxu0 0.0
        %1843 = vmatprep.subr.mxu0 0.0
        %1844 = vmatpush1.xpose.msra.mxu0 0.0
        %1845 = vmatprep.subr.mxu0 0.0
        %1846 = vmatpush1.xpose.msra.mxu0 0.0
        %1847 = vmatprep.subr.mxu0 0.0
        %1848 = vmatpush1.xpose.msra.mxu0 %v1817
        %1849 = vmatprep.subr.mxu0 0.0
        %1850 = vmatpush1.xpose.msra.mxu0 %v1814
        %1851 = vmatprep.subr.mxu0 0.0
        %1852 = vmatpush2.xpose.msra.mxu0 0.0
        %1853 = vmatprep.subr.mxu0 0.0
        %1854 = vmatpush2.xpose.msra.mxu0 0.0
        %1855 = vmatprep.subr.mxu0 0.0
        %1856 = vmatpush2.xpose.msra.mxu0 0.0
        %1857 = vmatprep.subr.mxu0 0.0
        %1858 = vmatpush2.xpose.msra.mxu0 0.0
        %1859 = vmatprep.subr.mxu0 0.0
        %1860 = vmatpush2.xpose.msra.mxu0 0.0
        %1861 = vmatprep.subr.mxu0 0.0
        %1862 = vmatpush2.xpose.msra.mxu0 0.0
        %1863 = vmatprep.subr.mxu0 0.0
        %1864 = vmatpush2.xpose.msra.mxu0 0.0
        %1865 = vmatprep.subr.mxu0 0.0
        %1866 = vmatpush2.xpose.msra.mxu0 0.0
        %1867 = vmatprep.subr.mxu0 0.0
        %1868 = vmatpush2.xpose.msra.mxu0 0.0
        %1869 = vmatprep.subr.mxu0 0.0
        %1870 = vmatpush2.xpose.msra.mxu0 0.0
        %1871 = vmatprep.subr.mxu0 0.0
        %1872 = vmatpush2.xpose.msra.mxu0 0.0
        %1873 = vmatprep.subr.mxu0 0.0
        %1874 = vmatpush2.xpose.msra.mxu0 0.0
        %1875 = vmatprep.subr.mxu0 0.0
        %1876 = vmatpush2.xpose.msra.mxu0 0.0
        %1877 = vmatprep.subr.mxu0 0.0
        %1878 = vmatpush2.xpose.msra.mxu0 0.0
        %1879 = vmatprep.subr.mxu0 0.0
        %1880 = vmatpush2.xpose.msra.mxu0 0.0
        %1881 = vmatprep.subr.mxu0 0.0
        %1882 = vmatpush2.xpose.msra.mxu0 0.0
        %1883 = vmatprep.mubr.f32.mxu0 0.0
        %1884 = vmatmul.mubr.f32.gmra.mxu0 %v1811
        %v1885 = vpop.f32.mrf.mxu0
        %v1886 = vadd.f32 %v1809, %v1885
        %v1887 = vpop.f32.mrf.mxu0
        %1888 = vdwg.mxu0
        %v1889 = vmax.f32 %v1886, 0.0
        %v1890 = vand.u32 2147483647, %v1886
        %v1891 = vsub.f32 0.0, %v1890
        %v1892 = vmul.f32 %v1891, 1.442695
        %v1893 = vpow.pop %v1892
        %v1894 = vadd.f32 %v1893, 1.0
        %v1895 = vlog2.pop %v1894
        %v1896 = vmul.f32 %v1895, 0.6931472
        %v1897 = vmul.f32 -0.5, %v1893
        %v1898 = vadd.f32 %v1897, 1.0
        %v1899 = vmul.f32 %v1898, %v1893
        %v1900 = vand.u32 2147483647, %v1893
        %vm1901 = vcmp.lt.f32.partialorder %v1900, 0.0004427343
        %v1902 = vsel %vm1901, %v1899, %v1896
        %v1903 = vadd.f32 %v1889, %v1902
        %v1904 = vmul.f32 %v1903, %v417
        %vm1905 = vcmask 122880
        %1906 = vst.msk [vmem:[%s394] sm:$0x1] %vm1905, %v1904
        %s1907 = sand.u32 %s264, 1
        %s1908 = scalar_lea.sflag [#allocation4], %s1907
        %s1909 = sand.u32 %s264, 1
        %s1910 = scalar_lea.vmem [#allocation3], %s1909
        // Predicated region
        $region61: #{tpu_custom_call.1} parent=59 // pred_check
          %p1911 = pneg %p274
        $region62: #{tpu_custom_call.1} parent=59 // pred_check_branch
          %1913 = sbr.rel (%p1911) target = $region64
        $region63: #{tpu_custom_call.1} parent=59 // pred_region
          %s1915 = ssub.s32 16, 16
          %1916 = vsyncadd %s1908, %s1915
          %s1917 = smul.addr %s26, 16
          %s1918 = scalar_lea.hbm %s10, %s1917
          %s1920 = sshll.u32 %s1910, 4
          %s1921 = int_to_ptr.vmem [resolvable:$true] %s1920
          %1923 = dma.vmem_to_hbm [thread:$0]  %s1921, 16, %s1918, %s1908
        $region64: #{tpu_custom_call.1} parent=59 // pred_fallthru
          _
      $region60: #{tpu_custom_call.1} parent=5 // pred_fallthru
        _
      %p1924 = scmp.le.s32.totalorder 2, %s21
      // Predicated region
      $region65: #{tpu_custom_call.1} parent=5 // pred_check
        %p1925 = pneg %p1924
      $region66: #{tpu_custom_call.1} parent=5 // pred_check_branch
        %1927 = sbr.rel (%p1925) target = $region68
      $region67: #{tpu_custom_call.1} parent=5 // pred_region
        %s1928 = ssub.s32 %s21, 2
        // Predicated region
        $region69: #{tpu_custom_call.1} parent=67 // pred_check
          %p1929 = pneg %p280
        $region70: #{tpu_custom_call.1} parent=67 // pred_check_branch
          %1931 = sbr.rel (%p1929) target = $region72
        $region71: #{tpu_custom_call.1} parent=67 // pred_region
          %s1932 = sand.u32 %s265, 1
          %s1933 = scalar_lea.sflag [#allocation4], %s1932
          %s1934 = sand.u32 %s265, 1
          %s1935 = scalar_lea.vmem [#allocation3], %s1934
          %1936 = dma.done %s1933, 16
        $region72: #{tpu_custom_call.1} parent=67 // pred_fallthru
          _
      $region68: #{tpu_custom_call.1} parent=5 // pred_fallthru
        _
    $region6: #{tpu_custom_call.1} parent=1 // loop_footer
      %s25 = sadd.s32 1, %s21
    $region7: #{tpu_custom_call.1} parent=1 // loop_footer_branch
      %20 = sbr.rel target = $region3
    $region8: #{tpu_custom_call.1} parent=1 // loop_exit
      _
    %1937 = vsyncpa [#allocation4], 1
    %s1938 = scalar_lea.sflag [#allocation4], 1
    %1939 = vsyncpa %s1938, 1

</llo_original>
